<compile_context>
chip_gen: v7x
topology: tpu7x:2x2x1
jax: 0.10.0
libtpu: 0.0.40
codegen_flags: <defaults>
</compile_context>

<pallas_src>
import functools
import numpy as np
import jax
import jax.numpy as jnp
from jax import lax
from jax.experimental import pallas as pl
from jax.experimental.pallas import tpu as pltpu

# ---- model constants (fixed by the PyTorch module + chosen input length) ----
B = 2            # demo batch
L = 8            # input sequence length  -> final flatten size = 64*2 = 128
C1, C2, C3 = 32, 32, 64
K = 3
PAD = 2
H1, H2 = 24, 3

HP = 128         # fused-linear output lane-padded 3 -> 128 (dense final store)

# derived static sequence lengths
L1 = L + 2 * PAD - K + 1      # 10  conv1 out
P1 = L1 // 2                  # 5   pool1 out
L2 = P1 + 2 * PAD - K + 1     # 7   conv2 out
P2 = L2 // 2                  # 3   pool2 out
L3 = P2 + 2 * PAD - K + 1     # 5   conv3 out
P3 = L3 // 2                  # 2   pool3 out
FLAT = P3 * C3                # 128


def cnn_kernel(cols1_ref, w1_ref, b1_ref, w2_ref, b2_ref, w3_ref, b3_ref,
               wf_ref, bf_ref, out_ref, p1_buf, p2_buf, *, bb):
    """One batch block of `bb` samples; activations are time-major 2-D slabs
    (row = t*bb + b, channel on lanes); bb is a multiple of 8 so every bb-row
    group sits on a sublane-tile boundary."""
    f32 = jnp.float32

    def maxpool_relu(h, lo):
        # MaxPool1d(2) (floor mode) then ReLU (max and relu commute).
        # Layout-preserving reshape + max: no copy-materializing slices/concats.
        p, c = lo // 2, h.shape[1]
        he = h[:2 * p * bb].reshape(p, 2, bb, c)
        return jnp.maximum(jnp.maximum(he[:, 0], he[:, 1]),
                           0.0).reshape(p * bb, c)                # (p*bb, C)

    def store_padded(buf, pooled, p, c):
        # Write pooled slab into a VMEM scratch with PAD*bb zero rows on each
        # side.  Pad rows are zeroed every step (cheap: 2*PAD*bb rows) since
        # scratch is uninitialized and i==0 may never run on the second core.
        zeros = jnp.zeros((PAD * bb, c), f32)
        buf[0:PAD * bb, :] = zeros
        buf[(PAD + p) * bb:(2 * PAD + p) * bb, :] = zeros
        buf[PAD * bb:(PAD + p) * bb, :] = pooled

    def conv(buf, lo, cin, w_ref, b_ref):
        # K matmuls, each batched over all `lo` output steps, reading the
        # k-shifted window straight from the padded scratch ref:
        #   out[t*bb+b, :] = bias + sum_k buf[(t+k)*bb+b, :] @ w[k]
        acc = jnp.dot(buf[0:lo * bb, :], w_ref[0:cin, :],
                      preferred_element_type=f32)
        for k in range(1, K):
            acc = acc + jnp.dot(buf[k * bb:(k + lo) * bb, :],
                                w_ref[k * cin:(k + 1) * cin, :],
                                preferred_element_type=f32)
        return acc + b_ref[...]                                  # (lo*bb, Cout)

    # ---- conv1: wrapper pre-built the (L1*bb, K) im2col window matrix ----
    h1 = jnp.dot(cols1_ref[...], w1_ref[...],
                 preferred_element_type=f32) + b1_ref[...]       # (L1*bb, C1)
    store_padded(p1_buf, maxpool_relu(h1, L1), P1, C1)

    h2 = conv(p1_buf, L2, C1, w2_ref, b2_ref)                    # (L2*bb, C2)
    store_padded(p2_buf, maxpool_relu(h2, L2), P2, C2)

    h3 = conv(p2_buf, L3, C2, w3_ref, b3_ref)                    # (L3*bb, C3)
    g3 = maxpool_relu(h3, L3)                                    # (P3*bb, C3)

    # ---- flatten + fused linear1∘linear2 (flatten order folded into wf) ----
    z = jnp.dot(g3[0:bb], wf_ref[0:C3, :], preferred_element_type=f32)
    for t in range(1, P3):
        z = z + jnp.dot(g3[t * bb:(t + 1) * bb],
                        wf_ref[t * C3:(t + 1) * C3, :],
                        preferred_element_type=f32)
    z = z + bf_ref[...]                                          # (bb, HP)

    # ---- F.normalize(p=2, dim=1): lanes >= H2 are exactly zero, so the sum
    #      over all HP lanes equals the sum over the real 3 outputs. ----
    ss = jnp.sum(z * z, axis=-1, keepdims=True)
    out_ref[...] = z * lax.rsqrt(jnp.maximum(ss, 1e-24))         # == z / max(|z|, 1e-12)


def _round_up(x, m):
    return (x + m - 1) // m * m


def _prep_params(params):
    """Fold PyTorch layouts into kernel-friendly operands (once, outside)."""
    f32 = jnp.float32
    hi = lax.Precision.HIGHEST

    # Conv weights (Cout, Cin, K) -> stacked (K*Cin, Cout), row = k*Cin + c.
    w1 = jnp.transpose(params["w_c1"], (2, 1, 0)).reshape(K, C1).astype(f32)
    w2 = jnp.transpose(params["w_c2"], (2, 1, 0)).reshape(K * C1, C2).astype(f32)
    w3 = jnp.transpose(params["w_c3"], (2, 1, 0)).reshape(K * C2, C3).astype(f32)

    # PyTorch Flatten of (B, C3, P3) is channel-major (col = c*P3 + t); the
    # kernel flattens time-major (col = t*C3 + c) -> permute linear1 columns,
    # then fuse linear2 (no nonlinearity between them):
    #   z = flat @ (wl1'^T @ wl2^T) + (bl1 @ wl2^T + bl2)
    wl1 = (params["w_l1"].reshape(H1, C3, P3).transpose(0, 2, 1)
           .reshape(H1, FLAT).astype(f32))
    wl2t = params["w_l2"].T.astype(f32)                          # (H1, H2)
    wf = jnp.matmul(wl1.T, wl2t, precision=hi)                   # (FLAT, H2)
    bf = jnp.matmul(params["b_l1"].astype(f32), wl2t, precision=hi) + params["b_l2"]
    # Lane-pad the fused output 3 -> HP so the kernel's final store is dense.
    wf = jnp.pad(wf, ((0, 0), (0, HP - H2))).astype(f32)
    bf = jnp.pad(bf, (0, HP - H2)).reshape(1, HP).astype(f32)

    return (w1, params["b_c1"].reshape(1, C1).astype(f32),
            w2, params["b_c2"].reshape(1, C2).astype(f32),
            w3, params["b_c3"].reshape(1, C3).astype(f32),
            wf, bf)


def _pick_batch_tile(Bn, block_b):
    """Batch rows per grid step: large enough to amortize the ~0.35us
    per-grid-step pipeline overhead and fill the MXU M dimension, small enough
    not to pad tiny batches, and (when the batch allows it) giving >= 2 grid
    blocks so the parallel axis can shard across both v7x TensorCores."""
    if Bn <= 8:
        return _round_up(max(Bn, 1), 8)
    bb = _round_up((Bn + 1) // 2, 8)                 # at least 2 blocks
    return min(bb, _round_up(max(block_b, 8), 8))


def cnn_forward(x, params, *, block_b=256):
    """x: (B, L) float32 — matches the PyTorch forward (which does unsqueeze(1))."""
    Bn, Ln = x.shape
    assert Ln == L
    bb = _pick_batch_tile(Bn, block_b)
    Bp = _round_up(Bn, bb)
    nb = Bp // bb

    # conv1 im2col built in the wrapper: row = blk*L1*bb + t*bb + b, lane =
    # tap k (kept at K=3 lanes — the streamed activations are NOT padded up).
    # TODO(synk): at very large batch, build this window matrix in-kernel from
    # a (bb, L+2*PAD) block to avoid the extra XLA HBM round trip.
    xpad = jnp.pad(x.astype(jnp.float32), ((0, Bp - Bn), (PAD, PAD)))    # (Bp, L+4)
    cols1 = jnp.stack([xpad[:, k:k + L1] for k in range(K)], axis=-1)    # (Bp, L1, K)
    cols1 = (cols1.reshape(nb, bb, L1, K).transpose(0, 2, 1, 3)
             .reshape(nb * L1 * bb, K))

    w_args = _prep_params(params)

    # Weights / biases stay resident in VMEM (their block index never changes).
    resident = lambda a: pl.BlockSpec(a.shape, lambda i: (0, 0))
    out = pl.pallas_call(
        functools.partial(cnn_kernel, bb=bb),
        out_shape=jax.ShapeDtypeStruct((Bp, HP), jnp.float32),
        grid_spec=pltpu.PrefetchScalarGridSpec(
            num_scalar_prefetch=0,
            grid=(nb,),
            in_specs=[pl.BlockSpec((L1 * bb, K), lambda i: (i, 0))]
                     + [resident(a) for a in w_args],
            out_specs=pl.BlockSpec((bb, HP), lambda i: (i, 0)),
            scratch_shapes=[
                pltpu.VMEM(((P1 + 2 * PAD) * bb, C1), jnp.float32),  # padded pool1
                pltpu.VMEM(((P2 + 2 * PAD) * bb, C2), jnp.float32),  # padded pool2
            ]),
        compiler_params=pltpu.CompilerParams(
            dimension_semantics=("parallel",)),   # shard batch blocks across cores
    )(cols1, *w_args)

    return out[:Bn, :H2]


def init_params(key):
    """Deterministic PyTorch-default-style init (U(-1/sqrt(fan_in), +))."""
    ks = jax.random.split(key, 10)

    def u(k, shape, fan_in):
        b = 1.0 / np.sqrt(fan_in)
        return jax.random.uniform(k, shape, jnp.float32, -b, b)

    return dict(
        w_c1=u(ks[0], (C1, 1, K), 1 * K),   b_c1=u(ks[1], (C1,), 1 * K),
        w_c2=u(ks[2], (C2, C1, K), C1 * K), b_c2=u(ks[3], (C2,), C1 * K),
        w_c3=u(ks[4], (C3, C2, K), C2 * K), b_c3=u(ks[5], (C3,), C2 * K),
        w_l1=u(ks[6], (H1, FLAT), FLAT),    b_l1=u(ks[7], (H1,), FLAT),
        w_l2=u(ks[8], (H2, H1), H1),        b_l2=u(ks[9], (H2,), H1),
    )


def reference_forward(x, p):
    """Pure numpy replica of the PyTorch forward (for verification)."""
    def conv1d(h, w, b, pad):
        Bn, Cin, Ln = h.shape
        Cout, _, Kn = w.shape
        hp = np.pad(h, ((0, 0), (0, 0), (pad, pad)))
        Lo = Ln + 2 * pad - Kn + 1
        out = np.zeros((Bn, Cout, Lo), np.float32)
        for t in range(Lo):
            out[:, :, t] = np.einsum("bck,ock->bo", hp[:, :, t:t + Kn], w) + b
        return out

    def maxpool2(h):
        Lo = h.shape[2] // 2
        return h[:, :, :2 * Lo].reshape(h.shape[0], h.shape[1], Lo, 2).max(-1)

    h = x[:, None, :].astype(np.float32)
    h = np.maximum(maxpool2(conv1d(h, p["w_c1"], p["b_c1"], PAD)), 0.0)
    h = np.maximum(maxpool2(conv1d(h, p["w_c2"], p["b_c2"], PAD)), 0.0)
    h = np.maximum(maxpool2(conv1d(h, p["w_c3"], p["b_c3"], PAD)), 0.0)
    flat = h.reshape(h.shape[0], -1)                                   # (B, 128)
    y = flat @ p["w_l1"].T + p["b_l1"]
    z = y @ p["w_l2"].T + p["b_l2"]
    n = np.sqrt((z ** 2).sum(1, keepdims=True))
    return z / np.maximum(n, 1e-12)


if __name__ == "__main__":
    key = jax.random.PRNGKey(0)
    pkey, xkey = jax.random.split(key)
    params = init_params(pkey)
    x = jax.random.normal(xkey, (B, L), jnp.float32)

    out = jax.block_until_ready(cnn_forward(x, params))

    ref = reference_forward(np.asarray(x),
                            {k: np.asarray(v) for k, v in params.items()})
    assert out.shape == (B, H2)
    np.testing.assert_allclose(np.asarray(out), ref, rtol=1e-4, atol=1e-5)
    print("KERNEL_OK")
</pallas_src>

<mosaic_0001>
module attributes {stable_mosaic.version = 11 : i64} {
  func.func @cnn_kernel(%arg0: i32, %arg1: memref<80x3xf32, #tpu.memory_space<vmem>>, %arg2: memref<3x32xf32, #tpu.memory_space<vmem>>, %arg3: memref<1x32xf32, #tpu.memory_space<vmem>>, %arg4: memref<96x32xf32, #tpu.memory_space<vmem>>, %arg5: memref<1x32xf32, #tpu.memory_space<vmem>>, %arg6: memref<96x64xf32, #tpu.memory_space<vmem>>, %arg7: memref<1x64xf32, #tpu.memory_space<vmem>>, %arg8: memref<128x128xf32, #tpu.memory_space<vmem>>, %arg9: memref<1x128xf32, #tpu.memory_space<vmem>>, %arg10: memref<8x128xf32, #tpu.memory_space<vmem>>, %arg11: memref<72x32xf32, #tpu.memory_space<vmem>>, %arg12: memref<56x32xf32, #tpu.memory_space<vmem>>) attributes {dimension_semantics = [#tpu.dimension_semantics<parallel>], iteration_bounds = array<i64: 1>, scalar_prefetch = 0 : i64, scratch_operands = 2 : i64, tpu.core_type = #tpu.core_type<tc>, window_params = [{transform_indices = @transform_0, window_bounds = array<i64: 80, 3>}, {pipeline_mode = #tpu.pipeline_mode<synchronous>, transform_indices = @transform_1, window_bounds = array<i64: 3, 32>}, {pipeline_mode = #tpu.pipeline_mode<synchronous>, transform_indices = @transform_2, window_bounds = array<i64: 1, 32>}, {pipeline_mode = #tpu.pipeline_mode<synchronous>, transform_indices = @transform_3, window_bounds = array<i64: 96, 32>}, {pipeline_mode = #tpu.pipeline_mode<synchronous>, transform_indices = @transform_4, window_bounds = array<i64: 1, 32>}, {pipeline_mode = #tpu.pipeline_mode<synchronous>, transform_indices = @transform_5, window_bounds = array<i64: 96, 64>}, {pipeline_mode = #tpu.pipeline_mode<synchronous>, transform_indices = @transform_6, window_bounds = array<i64: 1, 64>}, {pipeline_mode = #tpu.pipeline_mode<synchronous>, transform_indices = @transform_7, window_bounds = array<i64: 128, 128>}, {pipeline_mode = #tpu.pipeline_mode<synchronous>, transform_indices = @transform_8, window_bounds = array<i64: 1, 128>}, {transform_indices = @transform_9, window_bounds = array<i64: 8, 128>}]} {
    %c0 = arith.constant 0 : index
    %c0_0 = arith.constant 0 : index
    %0 = vector.load %arg1[%c0, %c0_0] : memref<80x3xf32, #tpu.memory_space<vmem>>, vector<80x3xf32>
    %c0_1 = arith.constant 0 : index
    %c0_2 = arith.constant 0 : index
    %1 = vector.load %arg2[%c0_1, %c0_2] : memref<3x32xf32, #tpu.memory_space<vmem>>, vector<3x32xf32>
    %cst = arith.constant dense<0.000000e+00> : vector<80x32xf32>
    %2 = tpu.matmul %0, %1, %cst {dimension_numbers = #tpu.dot_dimension_numbers<[1], [0], [0], [1], [0, 0, 1, 1], [], []>} : vector<80x3xf32>, vector<3x32xf32>, vector<80x32xf32> -> vector<80x32xf32>
    %c0_3 = arith.constant 0 : index
    %c0_4 = arith.constant 0 : index
    %3 = vector.load %arg3[%c0_3, %c0_4] : memref<1x32xf32, #tpu.memory_space<vmem>>, vector<1x32xf32>
    %4 = vector.broadcast %3 : vector<1x32xf32> to vector<80x32xf32>
    %5 = arith.addf %2, %4 : vector<80x32xf32>
    %6 = vector.shape_cast %5 : vector<80x32xf32> to vector<5x2x8x32xf32>
    %7 = vector.extract_strided_slice %6 {offsets = [0, 0, 0, 0], sizes = [5, 1, 8, 32], strides = [1, 1, 1, 1]} : vector<5x2x8x32xf32> to vector<5x1x8x32xf32>
    %8 = vector.shape_cast %7 : vector<5x1x8x32xf32> to vector<5x8x32xf32>
    %9 = vector.extract_strided_slice %6 {offsets = [0, 1, 0, 0], sizes = [5, 1, 8, 32], strides = [1, 1, 1, 1]} : vector<5x2x8x32xf32> to vector<5x1x8x32xf32>
    %10 = vector.shape_cast %9 : vector<5x1x8x32xf32> to vector<5x8x32xf32>
    %11 = arith.maximumf %8, %10 : vector<5x8x32xf32>
    %cst_5 = arith.constant 0.000000e+00 : f32
    %12 = vector.broadcast %cst_5 : f32 to vector<5x8x32xf32>
    %13 = arith.maximumf %11, %12 : vector<5x8x32xf32>
    %14 = vector.shape_cast %13 : vector<5x8x32xf32> to vector<40x32xf32>
    %cst_6 = arith.constant 0.000000e+00 : f32
    %15 = vector.broadcast %cst_6 : f32 to vector<16x32xf32>
    %c0_7 = arith.constant 0 : index
    %c0_8 = arith.constant 0 : index
    %16 = vector.load %arg11[%c0_7, %c0_8] : memref<72x32xf32, #tpu.memory_space<vmem>>, vector<16x32xf32>
    tpu.vector_store %arg11[%c0_7, %c0_8], %15 {strides = array<i32>} : memref<72x32xf32, #tpu.memory_space<vmem>>, vector<16x32xf32>,
    %c56 = arith.constant 56 : index
    %c0_9 = arith.constant 0 : index
    %17 = vector.load %arg11[%c56, %c0_9] : memref<72x32xf32, #tpu.memory_space<vmem>>, vector<16x32xf32>
    tpu.vector_store %arg11[%c56, %c0_9], %15 {strides = array<i32>} : memref<72x32xf32, #tpu.memory_space<vmem>>, vector<16x32xf32>,
    %c16 = arith.constant 16 : index
    %c0_10 = arith.constant 0 : index
    %18 = vector.load %arg11[%c16, %c0_10] : memref<72x32xf32, #tpu.memory_space<vmem>>, vector<40x32xf32>
    tpu.vector_store %arg11[%c16, %c0_10], %14 {strides = array<i32>} : memref<72x32xf32, #tpu.memory_space<vmem>>, vector<40x32xf32>,
    %c0_11 = arith.constant 0 : index
    %c0_12 = arith.constant 0 : index
    %19 = vector.load %arg11[%c0_11, %c0_12] : memref<72x32xf32, #tpu.memory_space<vmem>>, vector<56x32xf32>
    %c0_13 = arith.constant 0 : index
    %c0_14 = arith.constant 0 : index
    %20 = vector.load %arg4[%c0_13, %c0_14] : memref<96x32xf32, #tpu.memory_space<vmem>>, vector<32x32xf32>
    %cst_15 = arith.constant dense<0.000000e+00> : vector<56x32xf32>
    %21 = tpu.matmul %19, %20, %cst_15 {dimension_numbers = #tpu.dot_dimension_numbers<[1], [0], [0], [1], [0, 0, 1, 1], [], []>} : vector<56x32xf32>, vector<32x32xf32>, vector<56x32xf32> -> vector<56x32xf32>
    %c8 = arith.constant 8 : index
    %c0_16 = arith.constant 0 : index
    %22 = vector.load %arg11[%c8, %c0_16] : memref<72x32xf32, #tpu.memory_space<vmem>>, vector<56x32xf32>
    %c32 = arith.constant 32 : index
    %c0_17 = arith.constant 0 : index
    %23 = vector.load %arg4[%c32, %c0_17] : memref<96x32xf32, #tpu.memory_space<vmem>>, vector<32x32xf32>
    %cst_18 = arith.constant dense<0.000000e+00> : vector<56x32xf32>
    %24 = tpu.matmul %22, %23, %cst_18 {dimension_numbers = #tpu.dot_dimension_numbers<[1], [0], [0], [1], [0, 0, 1, 1], [], []>} : vector<56x32xf32>, vector<32x32xf32>, vector<56x32xf32> -> vector<56x32xf32>
    %25 = arith.addf %21, %24 : vector<56x32xf32>
    %c16_19 = arith.constant 16 : index
    %c0_20 = arith.constant 0 : index
    %26 = vector.load %arg11[%c16_19, %c0_20] : memref<72x32xf32, #tpu.memory_space<vmem>>, vector<56x32xf32>
    %c64 = arith.constant 64 : index
    %c0_21 = arith.constant 0 : index
    %27 = vector.load %arg4[%c64, %c0_21] : memref<96x32xf32, #tpu.memory_space<vmem>>, vector<32x32xf32>
    %cst_22 = arith.constant dense<0.000000e+00> : vector<56x32xf32>
    %28 = tpu.matmul %26, %27, %cst_22 {dimension_numbers = #tpu.dot_dimension_numbers<[1], [0], [0], [1], [0, 0, 1, 1], [], []>} : vector<56x32xf32>, vector<32x32xf32>, vector<56x32xf32> -> vector<56x32xf32>
    %29 = arith.addf %25, %28 : vector<56x32xf32>
    %c0_23 = arith.constant 0 : index
    %c0_24 = arith.constant 0 : index
    %30 = vector.load %arg5[%c0_23, %c0_24] : memref<1x32xf32, #tpu.memory_space<vmem>>, vector<1x32xf32>
    %31 = vector.broadcast %30 : vector<1x32xf32> to vector<56x32xf32>
    %32 = arith.addf %29, %31 : vector<56x32xf32>
    %33 = vector.extract_strided_slice %32 {offsets = [0, 0], sizes = [48, 32], strides = [1, 1]} : vector<56x32xf32> to vector<48x32xf32>
    %34 = vector.shape_cast %33 : vector<48x32xf32> to vector<3x2x8x32xf32>
    %35 = vector.extract_strided_slice %34 {offsets = [0, 0, 0, 0], sizes = [3, 1, 8, 32], strides = [1, 1, 1, 1]} : vector<3x2x8x32xf32> to vector<3x1x8x32xf32>
    %36 = vector.shape_cast %35 : vector<3x1x8x32xf32> to vector<3x8x32xf32>
    %37 = vector.extract_strided_slice %34 {offsets = [0, 1, 0, 0], sizes = [3, 1, 8, 32], strides = [1, 1, 1, 1]} : vector<3x2x8x32xf32> to vector<3x1x8x32xf32>
    %38 = vector.shape_cast %37 : vector<3x1x8x32xf32> to vector<3x8x32xf32>
    %39 = arith.maximumf %36, %38 : vector<3x8x32xf32>
    %cst_25 = arith.constant 0.000000e+00 : f32
    %40 = vector.broadcast %cst_25 : f32 to vector<3x8x32xf32>
    %41 = arith.maximumf %39, %40 : vector<3x8x32xf32>
    %42 = vector.shape_cast %41 : vector<3x8x32xf32> to vector<24x32xf32>
    %cst_26 = arith.constant 0.000000e+00 : f32
    %43 = vector.broadcast %cst_26 : f32 to vector<16x32xf32>
    %c0_27 = arith.constant 0 : index
    %c0_28 = arith.constant 0 : index
    %44 = vector.load %arg12[%c0_27, %c0_28] : memref<56x32xf32, #tpu.memory_space<vmem>>, vector<16x32xf32>
    tpu.vector_store %arg12[%c0_27, %c0_28], %43 {strides = array<i32>} : memref<56x32xf32, #tpu.memory_space<vmem>>, vector<16x32xf32>,
    %c40 = arith.constant 40 : index
    %c0_29 = arith.constant 0 : index
    %45 = vector.load %arg12[%c40, %c0_29] : memref<56x32xf32, #tpu.memory_space<vmem>>, vector<16x32xf32>
    tpu.vector_store %arg12[%c40, %c0_29], %43 {strides = array<i32>} : memref<56x32xf32, #tpu.memory_space<vmem>>, vector<16x32xf32>,
    %c16_30 = arith.constant 16 : index
    %c0_31 = arith.constant 0 : index
    %46 = vector.load %arg12[%c16_30, %c0_31] : memref<56x32xf32, #tpu.memory_space<vmem>>, vector<24x32xf32>
    tpu.vector_store %arg12[%c16_30, %c0_31], %42 {strides = array<i32>} : memref<56x32xf32, #tpu.memory_space<vmem>>, vector<24x32xf32>,
    %c0_32 = arith.constant 0 : index
    %c0_33 = arith.constant 0 : index
    %47 = vector.load %arg12[%c0_32, %c0_33] : memref<56x32xf32, #tpu.memory_space<vmem>>, vector<40x32xf32>
    %c0_34 = arith.constant 0 : index
    %c0_35 = arith.constant 0 : index
    %48 = vector.load %arg6[%c0_34, %c0_35] : memref<96x64xf32, #tpu.memory_space<vmem>>, vector<32x64xf32>
    %cst_36 = arith.constant dense<0.000000e+00> : vector<40x64xf32>
    %49 = tpu.matmul %47, %48, %cst_36 {dimension_numbers = #tpu.dot_dimension_numbers<[1], [0], [0], [1], [0, 0, 1, 1], [], []>} : vector<40x32xf32>, vector<32x64xf32>, vector<40x64xf32> -> vector<40x64xf32>
    %c8_37 = arith.constant 8 : index
    %c0_38 = arith.constant 0 : index
    %50 = vector.load %arg12[%c8_37, %c0_38] : memref<56x32xf32, #tpu.memory_space<vmem>>, vector<40x32xf32>
    %c32_39 = arith.constant 32 : index
    %c0_40 = arith.constant 0 : index
    %51 = vector.load %arg6[%c32_39, %c0_40] : memref<96x64xf32, #tpu.memory_space<vmem>>, vector<32x64xf32>
    %cst_41 = arith.constant dense<0.000000e+00> : vector<40x64xf32>
    %52 = tpu.matmul %50, %51, %cst_41 {dimension_numbers = #tpu.dot_dimension_numbers<[1], [0], [0], [1], [0, 0, 1, 1], [], []>} : vector<40x32xf32>, vector<32x64xf32>, vector<40x64xf32> -> vector<40x64xf32>
    %53 = arith.addf %49, %52 : vector<40x64xf32>
    %c16_42 = arith.constant 16 : index
    %c0_43 = arith.constant 0 : index
    %54 = vector.load %arg12[%c16_42, %c0_43] : memref<56x32xf32, #tpu.memory_space<vmem>>, vector<40x32xf32>
    %c64_44 = arith.constant 64 : index
    %c0_45 = arith.constant 0 : index
    %55 = vector.load %arg6[%c64_44, %c0_45] : memref<96x64xf32, #tpu.memory_space<vmem>>, vector<32x64xf32>
    %cst_46 = arith.constant dense<0.000000e+00> : vector<40x64xf32>
    %56 = tpu.matmul %54, %55, %cst_46 {dimension_numbers = #tpu.dot_dimension_numbers<[1], [0], [0], [1], [0, 0, 1, 1], [], []>} : vector<40x32xf32>, vector<32x64xf32>, vector<40x64xf32> -> vector<40x64xf32>
    %57 = arith.addf %53, %56 : vector<40x64xf32>
    %c0_47 = arith.constant 0 : index
    %c0_48 = arith.constant 0 : index
    %58 = vector.load %arg7[%c0_47, %c0_48] : memref<1x64xf32, #tpu.memory_space<vmem>>, vector<1x64xf32>
    %59 = vector.broadcast %58 : vector<1x64xf32> to vector<40x64xf32>
    %60 = arith.addf %57, %59 : vector<40x64xf32>
    %61 = vector.extract_strided_slice %60 {offsets = [0, 0], sizes = [32, 64], strides = [1, 1]} : vector<40x64xf32> to vector<32x64xf32>
    %62 = vector.shape_cast %61 : vector<32x64xf32> to vector<2x2x8x64xf32>
    %63 = vector.extract_strided_slice %62 {offsets = [0, 0, 0, 0], sizes = [2, 1, 8, 64], strides = [1, 1, 1, 1]} : vector<2x2x8x64xf32> to vector<2x1x8x64xf32>
    %64 = vector.shape_cast %63 : vector<2x1x8x64xf32> to vector<2x8x64xf32>
    %65 = vector.extract_strided_slice %62 {offsets = [0, 1, 0, 0], sizes = [2, 1, 8, 64], strides = [1, 1, 1, 1]} : vector<2x2x8x64xf32> to vector<2x1x8x64xf32>
    %66 = vector.shape_cast %65 : vector<2x1x8x64xf32> to vector<2x8x64xf32>
    %67 = arith.maximumf %64, %66 : vector<2x8x64xf32>
    %cst_49 = arith.constant 0.000000e+00 : f32
    %68 = vector.broadcast %cst_49 : f32 to vector<2x8x64xf32>
    %69 = arith.maximumf %67, %68 : vector<2x8x64xf32>
    %70 = vector.shape_cast %69 : vector<2x8x64xf32> to vector<16x64xf32>
    %71 = vector.extract_strided_slice %70 {offsets = [0, 0], sizes = [8, 64], strides = [1, 1]} : vector<16x64xf32> to vector<8x64xf32>
    %c0_50 = arith.constant 0 : index
    %c0_51 = arith.constant 0 : index
    %72 = vector.load %arg8[%c0_50, %c0_51] : memref<128x128xf32, #tpu.memory_space<vmem>>, vector<64x128xf32>
    %cst_52 = arith.constant dense<0.000000e+00> : vector<8x128xf32>
    %73 = tpu.matmul %71, %72, %cst_52 {dimension_numbers = #tpu.dot_dimension_numbers<[1], [0], [0], [1], [0, 0, 1, 1], [], []>} : vector<8x64xf32>, vector<64x128xf32>, vector<8x128xf32> -> vector<8x128xf32>
    %74 = vector.extract_strided_slice %70 {offsets = [8, 0], sizes = [8, 64], strides = [1, 1]} : vector<16x64xf32> to vector<8x64xf32>
    %c64_53 = arith.constant 64 : index
    %c0_54 = arith.constant 0 : index
    %75 = vector.load %arg8[%c64_53, %c0_54] : memref<128x128xf32, #tpu.memory_space<vmem>>, vector<64x128xf32>
    %cst_55 = arith.constant dense<0.000000e+00> : vector<8x128xf32>
    %76 = tpu.matmul %74, %75, %cst_55 {dimension_numbers = #tpu.dot_dimension_numbers<[1], [0], [0], [1], [0, 0, 1, 1], [], []>} : vector<8x64xf32>, vector<64x128xf32>, vector<8x128xf32> -> vector<8x128xf32>
    %77 = arith.addf %73, %76 : vector<8x128xf32>
    %c0_56 = arith.constant 0 : index
    %c0_57 = arith.constant 0 : index
    %78 = vector.load %arg9[%c0_56, %c0_57] : memref<1x128xf32, #tpu.memory_space<vmem>>, vector<1x128xf32>
    %79 = vector.broadcast %78 : vector<1x128xf32> to vector<8x128xf32>
    %80 = arith.addf %77, %79 : vector<8x128xf32>
    %81 = arith.mulf %80, %80 : vector<8x128xf32>
    %cst_58 = arith.constant dense<0.000000e+00> : vector<8xf32>
    %82 = vector.multi_reduction <add>, %81, %cst_58 [1] : vector<8x128xf32> to vector<8xf32>
    %83 = vector.shape_cast %82 : vector<8xf32> to vector<8x1xf32>
    %cst_59 = arith.constant 1.000000e-24 : f32
    %84 = vector.broadcast %cst_59 : f32 to vector<8x1xf32>
    %85 = arith.maximumf %83, %84 : vector<8x1xf32>
    %86 = math.rsqrt %85 : vector<8x1xf32>
    %87 = vector.broadcast %86 : vector<8x1xf32> to vector<8x128xf32>
    %88 = arith.mulf %80, %87 : vector<8x128xf32>
    %c0_60 = arith.constant 0 : index
    %c0_61 = arith.constant 0 : index
    %89 = vector.load %arg10[%c0_60, %c0_61] : memref<8x128xf32, #tpu.memory_space<vmem>>, vector<8x128xf32>
    tpu.vector_store %arg10[%c0_60, %c0_61], %88 {strides = array<i32>} : memref<8x128xf32, #tpu.memory_space<vmem>>, vector<8x128xf32>,
    return
  }
  func.func @transform_0(%arg0: i32) -> (i32, i32) {
    %c0_i32 = arith.constant 0 : i32
    %c0_i32_0 = arith.constant 0 : i32
    return %arg0, %c0_i32 : i32, i32
  }
  func.func @transform_1(%arg0: i32) -> (i32, i32) {
    %c0_i32 = arith.constant 0 : i32
    %c0_i32_0 = arith.constant 0 : i32
    %c0_i32_1 = arith.constant 0 : i32
    return %c0_i32, %c0_i32_0 : i32, i32
  }
  func.func @transform_2(%arg0: i32) -> (i32, i32) {
    %c0_i32 = arith.constant 0 : i32
    %c0_i32_0 = arith.constant 0 : i32
    %c0_i32_1 = arith.constant 0 : i32
    return %c0_i32, %c0_i32_0 : i32, i32
  }
  func.func @transform_3(%arg0: i32) -> (i32, i32) {
    %c0_i32 = arith.constant 0 : i32
    %c0_i32_0 = arith.constant 0 : i32
    %c0_i32_1 = arith.constant 0 : i32
    return %c0_i32, %c0_i32_0 : i32, i32
  }
  func.func @transform_4(%arg0: i32) -> (i32, i32) {
    %c0_i32 = arith.constant 0 : i32
    %c0_i32_0 = arith.constant 0 : i32
    %c0_i32_1 = arith.constant 0 : i32
    return %c0_i32, %c0_i32_0 : i32, i32
  }
  func.func @transform_5(%arg0: i32) -> (i32, i32) {
    %c0_i32 = arith.constant 0 : i32
    %c0_i32_0 = arith.constant 0 : i32
    %c0_i32_1 = arith.constant 0 : i32
    return %c0_i32, %c0_i32_0 : i32, i32
  }
  func.func @transform_6(%arg0: i32) -> (i32, i32) {
    %c0_i32 = arith.constant 0 : i32
    %c0_i32_0 = arith.constant 0 : i32
    %c0_i32_1 = arith.constant 0 : i32
    return %c0_i32, %c0_i32_0 : i32, i32
  }
  func.func @transform_7(%arg0: i32) -> (i32, i32) {
    %c0_i32 = arith.constant 0 : i32
    %c0_i32_0 = arith.constant 0 : i32
    %c0_i32_1 = arith.constant 0 : i32
    return %c0_i32, %c0_i32_0 : i32, i32
  }
  func.func @transform_8(%arg0: i32) -> (i32, i32) {
    %c0_i32 = arith.constant 0 : i32
    %c0_i32_0 = arith.constant 0 : i32
    %c0_i32_1 = arith.constant 0 : i32
    return %c0_i32, %c0_i32_0 : i32, i32
  }
  func.func @transform_9(%arg0: i32) -> (i32, i32) {
    %c0_i32 = arith.constant 0 : i32
    %c0_i32_0 = arith.constant 0 : i32
    return %arg0, %c0_i32 : i32, i32
  }
}

</mosaic_0001>

<llo_original>
// kernel: tpu_custom_call.1
$region0: #{tpu_custom_call.1}
  #allocation0 [shape = 'u32[]', space=smem, size = 0x4, offset = 0x4, fixed_abs, tag = 'smem constant byte address 0x4 - core index']
  #allocation1 [shape = 'u32[144,128]{1,0:T(1,128)}', space=vmem, size = 0x12000, scoped, tag = 'internal scratch']
  #allocation2 [shape = 'f32[72,32]{1,0:T(8,128)}', space=vmem, size = 0x9000, scoped, tag = 'scratch operand']
  #allocation3 [shape = 'f32[56,32]{1,0:T(8,128)}', space=vmem, size = 0x7000, scoped, tag = 'scratch operand']
  %s0 = inlined_call_operand.vmem [shape: f32[80,3], index: 0, kind: input, shape index: {}]
  %s1 = inlined_call_operand.vmem [shape: f32[3,32], index: 1, kind: input, shape index: {}]
  %s2 = inlined_call_operand.vmem [shape: f32[1,32], index: 2, kind: input, shape index: {}]
  %s3 = inlined_call_operand.vmem [shape: f32[96,32], index: 3, kind: input, shape index: {}]
  %s4 = inlined_call_operand.vmem [shape: f32[1,32], index: 4, kind: input, shape index: {}]
  %s5 = inlined_call_operand.vmem [shape: f32[96,64], index: 5, kind: input, shape index: {}]
  %s6 = inlined_call_operand.vmem [shape: f32[1,64], index: 6, kind: input, shape index: {}]
  %s7 = inlined_call_operand.vmem [shape: f32[128,128], index: 7, kind: input, shape index: {}]
  %s8 = inlined_call_operand.vmem [shape: f32[1,128], index: 8, kind: input, shape index: {}]
  %s9 = inlined_call_operand.hbm [shape: f32[8,128], index: 9, kind: output, shape index: {}]
  %s10 = sld [smem:[#allocation0]]
  $region46: #{tpu_custom_call.1} parent=0
    _
  %s12 = ssub.s32 1, %s10
  %s13 = scalar_select 0, %s12, %s10
  $region1: #{tpu_custom_call.1} parent=0
    #allocation4 [shape = 'u8[4096]{0}', space=vmem, size = 0x1000, scoped, tag = 'output window, operand 0, single buffered']
    #allocation5 [shape = 's32[1]{0}', space=sflag, size = 0x4, scoped, tag = 'scoped memory for tpu_custom_call.1']
    %14 = vsyncpa [#allocation5], 0
    // Predicated region
    $region2: #{tpu_custom_call.1} parent=1 // pred_check
      _
    $region3: #{tpu_custom_call.1} parent=1 // pred_check_branch
      %16 = sbr.rel (0) target = $region5
    $region4: #{tpu_custom_call.1} parent=1 // pred_region
      _
    $region5: #{tpu_custom_call.1} parent=1 // pred_fallthru
      _
    // Predicated region
    $region6: #{tpu_custom_call.1} parent=1 // pred_check
      _
    $region7: #{tpu_custom_call.1} parent=1 // pred_check_branch
      %18 = sbr.rel (0) target = $region9
    $region8: #{tpu_custom_call.1} parent=1 // pred_region
      _
    $region9: #{tpu_custom_call.1} parent=1 // pred_fallthru
      _
    // Predicated region
    $region10: #{tpu_custom_call.1} parent=1 // pred_check
      _
    $region11: #{tpu_custom_call.1} parent=1 // pred_check_branch
      %20 = sbr.rel (0) target = $region13
    $region12: #{tpu_custom_call.1} parent=1 // pred_region
      _
    $region13: #{tpu_custom_call.1} parent=1 // pred_fallthru
      _
    // Predicated region
    $region14: #{tpu_custom_call.1} parent=1 // pred_check
      _
    $region15: #{tpu_custom_call.1} parent=1 // pred_check_branch
      %22 = sbr.rel (0) target = $region17
    $region16: #{tpu_custom_call.1} parent=1 // pred_region
      _
    $region17: #{tpu_custom_call.1} parent=1 // pred_fallthru
      _
    // Predicated region
    $region18: #{tpu_custom_call.1} parent=1 // pred_check
      _
    $region19: #{tpu_custom_call.1} parent=1 // pred_check_branch
      %24 = sbr.rel (0) target = $region21
    $region20: #{tpu_custom_call.1} parent=1 // pred_region
      _
    $region21: #{tpu_custom_call.1} parent=1 // pred_fallthru
      _
    // Predicated region
    $region22: #{tpu_custom_call.1} parent=1 // pred_check
      _
    $region23: #{tpu_custom_call.1} parent=1 // pred_check_branch
      %26 = sbr.rel (0) target = $region25
    $region24: #{tpu_custom_call.1} parent=1 // pred_region
      _
    $region25: #{tpu_custom_call.1} parent=1 // pred_fallthru
      _
    // Predicated region
    $region26: #{tpu_custom_call.1} parent=1 // pred_check
      _
    $region27: #{tpu_custom_call.1} parent=1 // pred_check_branch
      %28 = sbr.rel (0) target = $region29
    $region28: #{tpu_custom_call.1} parent=1 // pred_region
      _
    $region29: #{tpu_custom_call.1} parent=1 // pred_fallthru
      _
    // Predicated region
    $region30: #{tpu_custom_call.1} parent=1 // pred_check
      _
    $region31: #{tpu_custom_call.1} parent=1 // pred_check_branch
      %30 = sbr.rel (0) target = $region33
    $region32: #{tpu_custom_call.1} parent=1 // pred_region
      _
    $region33: #{tpu_custom_call.1} parent=1 // pred_fallthru
      _
    // Predicated region
    $region34: #{tpu_custom_call.1} parent=1 // pred_check
      _
    $region35: #{tpu_custom_call.1} parent=1 // pred_check_branch
      %32 = sbr.rel (0) target = $region37
    $region36: #{tpu_custom_call.1} parent=1 // pred_region
      _
    $region37: #{tpu_custom_call.1} parent=1 // pred_fallthru
      _
    %v33 = vld [vmem:[%s0] sm:$0xff]
    %v34 = vld [vmem:[%s0 + $0x8] sm:$0xff]
    %v35 = vld [vmem:[%s0 + $0x10] sm:$0xff]
    %v36 = vld [vmem:[%s0 + $0x18] sm:$0xff]
    %v37 = vld [vmem:[%s0 + $0x20] sm:$0xff]
    %v38 = vld [vmem:[%s0 + $0x28] sm:$0xff]
    %v39 = vld [vmem:[%s0 + $0x30] sm:$0xff]
    %v40 = vld [vmem:[%s0 + $0x38] sm:$0xff]
    %v41 = vld [vmem:[%s0 + $0x40] sm:$0xff]
    %v42 = vld [vmem:[%s0 + $0x48] sm:$0xff]
    %v43 = vld [vmem:[%s1] sm:$0x7]
    %v44 = vld [vmem:[%s2] sm:$0x1]
    %v46 = vlaneseq
    %v47 = vshrl.u32 %v46, 7
    %v48 = vsub.s32 0, %v47
    %v49 = vrot.slane %v44, %v48
    %vm51 = vcmask 23552
    %v53 = vsel %vm51, %v33, 0
    %v56 = vsel %vm51, %v34, 0
    %v59 = vsel %vm51, %v35, 0
    %v62 = vsel %vm51, %v36, 0
    %v65 = vsel %vm51, %v37, 0
    %v68 = vsel %vm51, %v38, 0
    %v71 = vsel %vm51, %v39, 0
    %v74 = vsel %vm51, %v40, 0
    %v77 = vsel %vm51, %v41, 0
    %v80 = vsel %vm51, %v42, 0
    %vm82 = vcmask 1042432
    %v84 = vsel %vm82, %v43, 0
    %86 = vmatprep.subr.mxu0 0.0
    %87 = vmatpush1.msra.mxu0 %v84
    %88 = vmatprep.subr.mxu0 0.0
    %89 = vmatpush1.msra.mxu0 0.0
    %90 = vmatprep.subr.mxu0 0.0
    %91 = vmatpush1.msra.mxu0 0.0
    %92 = vmatprep.subr.mxu0 0.0
    %93 = vmatpush1.msra.mxu0 0.0
    %94 = vmatprep.subr.mxu0 0.0
    %95 = vmatpush1.msra.mxu0 0.0
    %96 = vmatprep.subr.mxu0 0.0
    %97 = vmatpush1.msra.mxu0 0.0
    %98 = vmatprep.subr.mxu0 0.0
    %99 = vmatpush1.msra.mxu0 0.0
    %100 = vmatprep.subr.mxu0 0.0
    %101 = vmatpush1.msra.mxu0 0.0
    %102 = vmatprep.subr.mxu0 0.0
    %103 = vmatpush1.msra.mxu0 0.0
    %104 = vmatprep.subr.mxu0 0.0
    %105 = vmatpush1.msra.mxu0 0.0
    %106 = vmatprep.subr.mxu0 0.0
    %107 = vmatpush1.msra.mxu0 0.0
    %108 = vmatprep.subr.mxu0 0.0
    %109 = vmatpush1.msra.mxu0 0.0
    %110 = vmatprep.subr.mxu0 0.0
    %111 = vmatpush1.msra.mxu0 0.0
    %112 = vmatprep.subr.mxu0 0.0
    %113 = vmatpush1.msra.mxu0 0.0
    %114 = vmatprep.subr.mxu0 0.0
    %115 = vmatpush1.msra.mxu0 0.0
    %116 = vmatprep.subr.mxu0 0.0
    %117 = vmatpush1.msra.mxu0 0.0
    %118 = vmatprep.subr.mxu0 0.0
    %119 = vmatpush1.msra.mxu0 0.0
    %120 = vmatprep.subr.mxu0 0.0
    %121 = vmatpush1.msra.mxu0 0.0
    %122 = vmatprep.subr.mxu0 0.0
    %123 = vmatpush1.msra.mxu0 0.0
    %124 = vmatprep.subr.mxu0 0.0
    %125 = vmatpush1.msra.mxu0 0.0
    %126 = vmatprep.subr.mxu0 0.0
    %127 = vmatpush1.msra.mxu0 0.0
    %128 = vmatprep.subr.mxu0 0.0
    %129 = vmatpush1.msra.mxu0 0.0
    %130 = vmatprep.subr.mxu0 0.0
    %131 = vmatpush1.msra.mxu0 0.0
    %132 = vmatprep.subr.mxu0 0.0
    %133 = vmatpush1.msra.mxu0 0.0
    %134 = vmatprep.subr.mxu0 0.0
    %135 = vmatpush1.msra.mxu0 0.0
    %136 = vmatprep.subr.mxu0 0.0
    %137 = vmatpush1.msra.mxu0 0.0
    %138 = vmatprep.subr.mxu0 0.0
    %139 = vmatpush1.msra.mxu0 0.0
    %140 = vmatprep.subr.mxu0 0.0
    %141 = vmatpush1.msra.mxu0 0.0
    %142 = vmatprep.subr.mxu0 0.0
    %143 = vmatpush1.msra.mxu0 0.0
    %144 = vmatprep.subr.mxu0 0.0
    %145 = vmatpush1.msra.mxu0 0.0
    %146 = vmatprep.subr.mxu0 0.0
    %147 = vmatpush1.msra.mxu0 0.0
    %148 = vmatprep.subr.mxu0 0.0
    %149 = vmatpush1.msra.mxu0 0.0
    %150 = vmatprep.mubr.f32.mxu0 0.0
    %151 = vmatmul.mubr.f32.gmra.mrb[0].mxu0 %v53
    %v152 = vpop.f32.mrb[0].mxu0
    %v153 = vadd.f32 %v49, %v152
    %v154 = vpop.f32.mrb[0].mxu0
    %155 = vmatprep.mubr.f32.mxu0 0.0
    %156 = vmatmul.mubr.f32.gmra.mrb[0].mxu0 %v56
    %v157 = vpop.f32.mrb[0].mxu0
    %v158 = vadd.f32 %v49, %v157
    %v159 = vpop.f32.mrb[0].mxu0
    %160 = vmatprep.mubr.f32.mxu0 0.0
    %161 = vmatmul.mubr.f32.gmra.mrb[0].mxu0 %v59
    %v162 = vpop.f32.mrb[0].mxu0
    %v163 = vadd.f32 %v49, %v162
    %v164 = vpop.f32.mrb[0].mxu0
    %165 = vmatprep.mubr.f32.mxu0 0.0
    %166 = vmatmul.mubr.f32.gmra.mrb[0].mxu0 %v62
    %v167 = vpop.f32.mrb[0].mxu0
    %v168 = vadd.f32 %v49, %v167
    %v169 = vpop.f32.mrb[0].mxu0
    %170 = vmatprep.mubr.f32.mxu0 0.0
    %171 = vmatmul.mubr.f32.gmra.mrb[0].mxu0 %v65
    %v172 = vpop.f32.mrb[0].mxu0
    %v173 = vadd.f32 %v49, %v172
    %v174 = vpop.f32.mrb[0].mxu0
    %175 = vmatprep.mubr.f32.mxu0 0.0
    %176 = vmatmul.mubr.f32.gmra.mrb[0].mxu0 %v68
    %v177 = vpop.f32.mrb[0].mxu0
    %v178 = vadd.f32 %v49, %v177
    %v179 = vpop.f32.mrb[0].mxu0
    %180 = vmatprep.mubr.f32.mxu0 0.0
    %181 = vmatmul.mubr.f32.gmra.mrb[0].mxu0 %v71
    %v182 = vpop.f32.mrb[0].mxu0
    %v183 = vadd.f32 %v49, %v182
    %v184 = vpop.f32.mrb[0].mxu0
    %185 = vmatprep.mubr.f32.mxu0 0.0
    %186 = vmatmul.mubr.f32.gmra.mrb[0].mxu0 %v74
    %v187 = vpop.f32.mrb[0].mxu0
    %v188 = vadd.f32 %v49, %v187
    %v189 = vpop.f32.mrb[0].mxu0
    %190 = vmatprep.mubr.f32.mxu0 0.0
    %191 = vmatmul.mubr.f32.gmra.mrb[0].mxu0 %v77
    %v192 = vpop.f32.mrb[0].mxu0
    %v193 = vadd.f32 %v49, %v192
    %v194 = vpop.f32.mrb[0].mxu0
    %195 = vmatprep.mubr.f32.mxu0 0.0
    %196 = vmatmul.mubr.f32.gmra.mrb[0].mxu0 %v80
    %v197 = vpop.f32.mrb[0].mxu0
    %v198 = vadd.f32 %v49, %v197
    %v199 = vpop.f32.mrb[0].mxu0
    %200 = vdwg.mxu0
    %v201 = vmax.f32 %v153, %v158
    %v202 = vmax.f32 %v163, %v168
    %v203 = vmax.f32 %v173, %v178
    %v204 = vmax.f32 %v183, %v188
    %v205 = vmax.f32 %v193, %v198
    %v206 = vmax.f32 %v201, 0.0
    %v207 = vmax.f32 %v202, 0.0
    %v208 = vmax.f32 %v203, 0.0
    %v209 = vmax.f32 %v204, 0.0
    %v210 = vmax.f32 %v205, 0.0
    %vm211 = vcmask 261120
    %212 = vst.msk [vmem:[#allocation2] sm:$0xff] %vm211, 0.0
    %213 = vst.msk [vmem:[#allocation2 + $0x8] sm:$0xff] %vm211, 0.0
    %214 = vst.msk [vmem:[#allocation2 + $0x38] sm:$0xff] %vm211, 0.0
    %215 = vst.msk [vmem:[#allocation2 + $0x40] sm:$0xff] %vm211, 0.0
    %216 = vst.msk [vmem:[#allocation2 + $0x10] sm:$0xff] %vm211, %v206
    %217 = vst.msk [vmem:[#allocation2 + $0x18] sm:$0xff] %vm211, %v207
    %218 = vst.msk [vmem:[#allocation2 + $0x20] sm:$0xff] %vm211, %v208
    %219 = vst.msk [vmem:[#allocation2 + $0x28] sm:$0xff] %vm211, %v209
    %220 = vst.msk [vmem:[#allocation2 + $0x30] sm:$0xff] %vm211, %v210
    %v221 = vld [vmem:[#allocation2] sm:$0xff]
    %v222 = vld [vmem:[#allocation2 + $0x8] sm:$0xff]
    %v223 = vld [vmem:[#allocation2 + $0x10] sm:$0xff]
    %v224 = vld [vmem:[#allocation2 + $0x18] sm:$0xff]
    %v225 = vld [vmem:[#allocation2 + $0x20] sm:$0xff]
    %v226 = vld [vmem:[#allocation2 + $0x28] sm:$0xff]
    %v227 = vld [vmem:[#allocation2 + $0x30] sm:$0xff]
    %v228 = vld [vmem:[%s3] sm:$0xff]
    %v229 = vld [vmem:[%s3 + $0x8] sm:$0xff]
    %v230 = vld [vmem:[%s3 + $0x10] sm:$0xff]
    %v231 = vld [vmem:[%s3 + $0x18] sm:$0xff]
    %v232 = vld [vmem:[#allocation2 + $0x38] sm:$0xff]
    %v233 = vld [vmem:[%s3 + $0x20] sm:$0xff]
    %v234 = vld [vmem:[%s3 + $0x28] sm:$0xff]
    %v235 = vld [vmem:[%s3 + $0x30] sm:$0xff]
    %v236 = vld [vmem:[%s3 + $0x38] sm:$0xff]
    %v238 = vsel %vm211, %v222, 0
    %v241 = vsel %vm211, %v223, 0
    %v244 = vsel %vm211, %v224, 0
    %v247 = vsel %vm211, %v225, 0
    %v250 = vsel %vm211, %v226, 0
    %v253 = vsel %vm211, %v227, 0
    %v256 = vsel %vm211, %v232, 0
    %258 = vmatprep.subr.mxu0 0.0
    %259 = vmatpush1.msra.mxu0 %v233
    %260 = vmatprep.subr.mxu0 0.0
    %261 = vmatpush1.msra.mxu0 %v234
    %262 = vmatprep.subr.mxu0 0.0
    %263 = vmatpush1.msra.mxu0 %v235
    %264 = vmatprep.subr.mxu0 0.0
    %265 = vmatpush1.msra.mxu0 %v236
    %266 = vmatprep.subr.mxu0 0.0
    %267 = vmatpush1.msra.mxu0 0.0
    %268 = vmatprep.subr.mxu0 0.0
    %269 = vmatpush1.msra.mxu0 0.0
    %270 = vmatprep.subr.mxu0 0.0
    %271 = vmatpush1.msra.mxu0 0.0
    %272 = vmatprep.subr.mxu0 0.0
    %273 = vmatpush1.msra.mxu0 0.0
    %274 = vmatprep.subr.mxu0 0.0
    %275 = vmatpush1.msra.mxu0 0.0
    %276 = vmatprep.subr.mxu0 0.0
    %277 = vmatpush1.msra.mxu0 0.0
    %278 = vmatprep.subr.mxu0 0.0
    %279 = vmatpush1.msra.mxu0 0.0
    %280 = vmatprep.subr.mxu0 0.0
    %281 = vmatpush1.msra.mxu0 0.0
    %282 = vmatprep.subr.mxu0 0.0
    %283 = vmatpush1.msra.mxu0 0.0
    %284 = vmatprep.subr.mxu0 0.0
    %285 = vmatpush1.msra.mxu0 0.0
    %286 = vmatprep.subr.mxu0 0.0
    %287 = vmatpush1.msra.mxu0 0.0
    %288 = vmatprep.subr.mxu0 0.0
    %289 = vmatpush1.msra.mxu0 0.0
    %290 = vmatprep.subr.mxu0 0.0
    %291 = vmatpush1.msra.mxu0 0.0
    %292 = vmatprep.subr.mxu0 0.0
    %293 = vmatpush1.msra.mxu0 0.0
    %294 = vmatprep.subr.mxu0 0.0
    %295 = vmatpush1.msra.mxu0 0.0
    %296 = vmatprep.subr.mxu0 0.0
    %297 = vmatpush1.msra.mxu0 0.0
    %298 = vmatprep.subr.mxu0 0.0
    %299 = vmatpush1.msra.mxu0 0.0
    %300 = vmatprep.subr.mxu0 0.0
    %301 = vmatpush1.msra.mxu0 0.0
    %302 = vmatprep.subr.mxu0 0.0
    %303 = vmatpush1.msra.mxu0 0.0
    %304 = vmatprep.subr.mxu0 0.0
    %305 = vmatpush1.msra.mxu0 0.0
    %306 = vmatprep.subr.mxu0 0.0
    %307 = vmatpush1.msra.mxu0 0.0
    %308 = vmatprep.subr.mxu0 0.0
    %309 = vmatpush1.msra.mxu0 0.0
    %310 = vmatprep.subr.mxu0 0.0
    %311 = vmatpush1.msra.mxu0 0.0
    %312 = vmatprep.subr.mxu0 0.0
    %313 = vmatpush1.msra.mxu0 0.0
    %314 = vmatprep.subr.mxu0 0.0
    %315 = vmatpush1.msra.mxu0 0.0
    %316 = vmatprep.subr.mxu0 0.0
    %317 = vmatpush1.msra.mxu0 0.0
    %318 = vmatprep.subr.mxu0 0.0
    %319 = vmatpush1.msra.mxu0 0.0
    %320 = vmatprep.subr.mxu0 0.0
    %321 = vmatpush1.msra.mxu0 0.0
    %322 = vmatprep.mubr.f32.mxu0 0.0
    %323 = vmatmul.mubr.f32.gmra.mrb[0].mxu0 %v238
    %v324 = vpop.f32.mrb[0].mxu0
    %v325 = vadd.f32 0.0, %v324
    %v326 = vpop.f32.mrb[0].mxu0
    %327 = vmatprep.mubr.f32.mxu0 0.0
    %328 = vmatmul.mubr.f32.gmra.mrb[0].mxu0 %v241
    %v329 = vpop.f32.mrb[0].mxu0
    %v330 = vadd.f32 0.0, %v329
    %v331 = vpop.f32.mrb[0].mxu0
    %332 = vmatprep.mubr.f32.mxu0 0.0
    %333 = vmatmul.mubr.f32.gmra.mrb[0].mxu0 %v244
    %v334 = vpop.f32.mrb[0].mxu0
    %v335 = vadd.f32 0.0, %v334
    %v336 = vpop.f32.mrb[0].mxu0
    %337 = vmatprep.mubr.f32.mxu0 0.0
    %338 = vmatmul.mubr.f32.gmra.mrb[0].mxu0 %v247
    %v339 = vpop.f32.mrb[0].mxu0
    %v340 = vadd.f32 0.0, %v339
    %v341 = vpop.f32.mrb[0].mxu0
    %342 = vmatprep.mubr.f32.mxu0 0.0
    %343 = vmatmul.mubr.f32.gmra.mrb[0].mxu0 %v250
    %v344 = vpop.f32.mrb[0].mxu0
    %v345 = vadd.f32 0.0, %v344
    %v346 = vpop.f32.mrb[0].mxu0
    %347 = vmatprep.mubr.f32.mxu0 0.0
    %348 = vmatmul.mubr.f32.gmra.mrb[0].mxu0 %v253
    %v349 = vpop.f32.mrb[0].mxu0
    %v350 = vadd.f32 0.0, %v349
    %v351 = vpop.f32.mrb[0].mxu0
    %352 = vmatprep.mubr.f32.mxu0 0.0
    %353 = vmatmul.mubr.f32.gmra.mrb[0].mxu0 %v256
    %v354 = vpop.f32.mrb[0].mxu0
    %v355 = vpop.f32.mrb[0].mxu0
    %356 = vdwg.mxu0
    %v358 = vsel %vm211, %v221, 0
    %360 = vmatprep.subr.mxu0 0.0
    %361 = vmatpush1.msra.mxu0 %v228
    %362 = vmatprep.subr.mxu0 0.0
    %363 = vmatpush1.msra.mxu0 %v229
    %364 = vmatprep.subr.mxu0 0.0
    %365 = vmatpush1.msra.mxu0 %v230
    %366 = vmatprep.subr.mxu0 0.0
    %367 = vmatpush1.msra.mxu0 %v231
    %368 = vmatprep.subr.mxu0 0.0
    %369 = vmatpush1.msra.mxu0 0.0
    %370 = vmatprep.subr.mxu0 0.0
    %371 = vmatpush1.msra.mxu0 0.0
    %372 = vmatprep.subr.mxu0 0.0
    %373 = vmatpush1.msra.mxu0 0.0
    %374 = vmatprep.subr.mxu0 0.0
    %375 = vmatpush1.msra.mxu0 0.0
    %376 = vmatprep.subr.mxu0 0.0
    %377 = vmatpush1.msra.mxu0 0.0
    %378 = vmatprep.subr.mxu0 0.0
    %379 = vmatpush1.msra.mxu0 0.0
    %380 = vmatprep.subr.mxu0 0.0
    %381 = vmatpush1.msra.mxu0 0.0
    %382 = vmatprep.subr.mxu0 0.0
    %383 = vmatpush1.msra.mxu0 0.0
    %384 = vmatprep.subr.mxu0 0.0
    %385 = vmatpush1.msra.mxu0 0.0
    %386 = vmatprep.subr.mxu0 0.0
    %387 = vmatpush1.msra.mxu0 0.0
    %388 = vmatprep.subr.mxu0 0.0
    %389 = vmatpush1.msra.mxu0 0.0
    %390 = vmatprep.subr.mxu0 0.0
    %391 = vmatpush1.msra.mxu0 0.0
    %392 = vmatprep.subr.mxu0 0.0
    %393 = vmatpush1.msra.mxu0 0.0
    %394 = vmatprep.subr.mxu0 0.0
    %395 = vmatpush1.msra.mxu0 0.0
    %396 = vmatprep.subr.mxu0 0.0
    %397 = vmatpush1.msra.mxu0 0.0
    %398 = vmatprep.subr.mxu0 0.0
    %399 = vmatpush1.msra.mxu0 0.0
    %400 = vmatprep.subr.mxu0 0.0
    %401 = vmatpush1.msra.mxu0 0.0
    %402 = vmatprep.subr.mxu0 0.0
    %403 = vmatpush1.msra.mxu0 0.0
    %404 = vmatprep.subr.mxu0 0.0
    %405 = vmatpush1.msra.mxu0 0.0
    %406 = vmatprep.subr.mxu0 0.0
    %407 = vmatpush1.msra.mxu0 0.0
    %408 = vmatprep.subr.mxu0 0.0
    %409 = vmatpush1.msra.mxu0 0.0
    %410 = vmatprep.subr.mxu0 0.0
    %411 = vmatpush1.msra.mxu0 0.0
    %412 = vmatprep.subr.mxu0 0.0
    %413 = vmatpush1.msra.mxu0 0.0
    %414 = vmatprep.subr.mxu0 0.0
    %415 = vmatpush1.msra.mxu0 0.0
    %416 = vmatprep.subr.mxu0 0.0
    %417 = vmatpush1.msra.mxu0 0.0
    %418 = vmatprep.subr.mxu0 0.0
    %419 = vmatpush1.msra.mxu0 0.0
    %420 = vmatprep.subr.mxu0 0.0
    %421 = vmatpush1.msra.mxu0 0.0
    %422 = vmatprep.subr.mxu0 0.0
    %423 = vmatpush1.msra.mxu0 0.0
    %424 = vmatprep.mubr.f32.mxu0 0.0
    %425 = vmatmul.mubr.f32.gmra.mrb[0].mxu0 %v358
    %v426 = vpop.f32.mrb[0].mxu0
    %v427 = vadd.f32 %v325, %v426
    %v428 = vpop.f32.mrb[0].mxu0
    %429 = vmatprep.mubr.f32.mxu0 0.0
    %430 = vmatmul.mubr.f32.gmra.mrb[0].mxu0 %v238
    %v431 = vpop.f32.mrb[0].mxu0
    %v432 = vadd.f32 %v330, %v431
    %v433 = vpop.f32.mrb[0].mxu0
    %434 = vmatprep.mubr.f32.mxu0 0.0
    %435 = vmatmul.mubr.f32.gmra.mrb[0].mxu0 %v241
    %v436 = vpop.f32.mrb[0].mxu0
    %v437 = vadd.f32 %v335, %v436
    %v438 = vpop.f32.mrb[0].mxu0
    %439 = vmatprep.mubr.f32.mxu0 0.0
    %440 = vmatmul.mubr.f32.gmra.mrb[0].mxu0 %v244
    %v441 = vpop.f32.mrb[0].mxu0
    %v442 = vadd.f32 %v340, %v441
    %v443 = vpop.f32.mrb[0].mxu0
    %444 = vmatprep.mubr.f32.mxu0 0.0
    %445 = vmatmul.mubr.f32.gmra.mrb[0].mxu0 %v247
    %v446 = vpop.f32.mrb[0].mxu0
    %v447 = vadd.f32 %v345, %v446
    %v448 = vpop.f32.mrb[0].mxu0
    %449 = vmatprep.mubr.f32.mxu0 0.0
    %450 = vmatmul.mubr.f32.gmra.mrb[0].mxu0 %v250
    %v451 = vpop.f32.mrb[0].mxu0
    %v452 = vadd.f32 %v350, %v451
    %v453 = vpop.f32.mrb[0].mxu0
    %454 = vmatprep.mubr.f32.mxu0 0.0
    %455 = vmatmul.mubr.f32.gmra.mrb[0].mxu0 %v253
    %v456 = vpop.f32.mrb[0].mxu0
    %v457 = vpop.f32.mrb[0].mxu0
    %458 = vdwg.mxu0
    %v459 = vld [vmem:[#allocation2 + $0x10] sm:$0xff]
    %v460 = vld [vmem:[#allocation2 + $0x18] sm:$0xff]
    %v461 = vld [vmem:[#allocation2 + $0x20] sm:$0xff]
    %v462 = vld [vmem:[#allocation2 + $0x28] sm:$0xff]
    %v463 = vld [vmem:[#allocation2 + $0x30] sm:$0xff]
    %v464 = vld [vmem:[#allocation2 + $0x38] sm:$0xff]
    %v465 = vld [vmem:[#allocation2 + $0x40] sm:$0xff]
    %v466 = vld [vmem:[%s3 + $0x40] sm:$0xff]
    %v467 = vld [vmem:[%s3 + $0x48] sm:$0xff]
    %v468 = vld [vmem:[%s3 + $0x50] sm:$0xff]
    %v469 = vld [vmem:[%s3 + $0x58] sm:$0xff]
    %v471 = vsel %vm211, %v459, 0
    %v474 = vsel %vm211, %v460, 0
    %v477 = vsel %vm211, %v461, 0
    %v480 = vsel %vm211, %v462, 0
    %v483 = vsel %vm211, %v463, 0
    %v486 = vsel %vm211, %v464, 0
    %v489 = vsel %vm211, %v465, 0
    %491 = vmatprep.subr.mxu0 0.0
    %492 = vmatpush1.msra.mxu0 %v466
    %493 = vmatprep.subr.mxu0 0.0
    %494 = vmatpush1.msra.mxu0 %v467
    %495 = vmatprep.subr.mxu0 0.0
    %496 = vmatpush1.msra.mxu0 %v468
    %497 = vmatprep.subr.mxu0 0.0
    %498 = vmatpush1.msra.mxu0 %v469
    %499 = vmatprep.subr.mxu0 0.0
    %500 = vmatpush1.msra.mxu0 0.0
    %501 = vmatprep.subr.mxu0 0.0
    %502 = vmatpush1.msra.mxu0 0.0
    %503 = vmatprep.subr.mxu0 0.0
    %504 = vmatpush1.msra.mxu0 0.0
    %505 = vmatprep.subr.mxu0 0.0
    %506 = vmatpush1.msra.mxu0 0.0
    %507 = vmatprep.subr.mxu0 0.0
    %508 = vmatpush1.msra.mxu0 0.0
    %509 = vmatprep.subr.mxu0 0.0
    %510 = vmatpush1.msra.mxu0 0.0
    %511 = vmatprep.subr.mxu0 0.0
    %512 = vmatpush1.msra.mxu0 0.0
    %513 = vmatprep.subr.mxu0 0.0
    %514 = vmatpush1.msra.mxu0 0.0
    %515 = vmatprep.subr.mxu0 0.0
    %516 = vmatpush1.msra.mxu0 0.0
    %517 = vmatprep.subr.mxu0 0.0
    %518 = vmatpush1.msra.mxu0 0.0
    %519 = vmatprep.subr.mxu0 0.0
    %520 = vmatpush1.msra.mxu0 0.0
    %521 = vmatprep.subr.mxu0 0.0
    %522 = vmatpush1.msra.mxu0 0.0
    %523 = vmatprep.subr.mxu0 0.0
    %524 = vmatpush1.msra.mxu0 0.0
    %525 = vmatprep.subr.mxu0 0.0
    %526 = vmatpush1.msra.mxu0 0.0
    %527 = vmatprep.subr.mxu0 0.0
    %528 = vmatpush1.msra.mxu0 0.0
    %529 = vmatprep.subr.mxu0 0.0
    %530 = vmatpush1.msra.mxu0 0.0
    %531 = vmatprep.subr.mxu0 0.0
    %532 = vmatpush1.msra.mxu0 0.0
    %533 = vmatprep.subr.mxu0 0.0
    %534 = vmatpush1.msra.mxu0 0.0
    %535 = vmatprep.subr.mxu0 0.0
    %536 = vmatpush1.msra.mxu0 0.0
    %537 = vmatprep.subr.mxu0 0.0
    %538 = vmatpush1.msra.mxu0 0.0
    %539 = vmatprep.subr.mxu0 0.0
    %540 = vmatpush1.msra.mxu0 0.0
    %541 = vmatprep.subr.mxu0 0.0
    %542 = vmatpush1.msra.mxu0 0.0
    %543 = vmatprep.subr.mxu0 0.0
    %544 = vmatpush1.msra.mxu0 0.0
    %545 = vmatprep.subr.mxu0 0.0
    %546 = vmatpush1.msra.mxu0 0.0
    %547 = vmatprep.subr.mxu0 0.0
    %548 = vmatpush1.msra.mxu0 0.0
    %549 = vmatprep.subr.mxu0 0.0
    %550 = vmatpush1.msra.mxu0 0.0
    %551 = vmatprep.subr.mxu0 0.0
    %552 = vmatpush1.msra.mxu0 0.0
    %553 = vmatprep.subr.mxu0 0.0
    %554 = vmatpush1.msra.mxu0 0.0
    %555 = vmatprep.mubr.f32.mxu0 0.0
    %556 = vmatmul.mubr.f32.gmra.mrb[0].mxu0 %v471
    %v557 = vpop.f32.mrb[0].mxu0
    %v558 = vadd.f32 0.0, %v557
    %v559 = vpop.f32.mrb[0].mxu0
    %560 = vmatprep.mubr.f32.mxu0 0.0
    %561 = vmatmul.mubr.f32.gmra.mrb[0].mxu0 %v474
    %v562 = vpop.f32.mrb[0].mxu0
    %v563 = vadd.f32 0.0, %v562
    %v564 = vpop.f32.mrb[0].mxu0
    %565 = vmatprep.mubr.f32.mxu0 0.0
    %566 = vmatmul.mubr.f32.gmra.mrb[0].mxu0 %v477
    %v567 = vpop.f32.mrb[0].mxu0
    %v568 = vadd.f32 0.0, %v567
    %v569 = vpop.f32.mrb[0].mxu0
    %570 = vmatprep.mubr.f32.mxu0 0.0
    %571 = vmatmul.mubr.f32.gmra.mrb[0].mxu0 %v480
    %v572 = vpop.f32.mrb[0].mxu0
    %v573 = vadd.f32 0.0, %v572
    %v574 = vpop.f32.mrb[0].mxu0
    %575 = vmatprep.mubr.f32.mxu0 0.0
    %576 = vmatmul.mubr.f32.gmra.mrb[0].mxu0 %v483
    %v577 = vpop.f32.mrb[0].mxu0
    %v578 = vadd.f32 0.0, %v577
    %v579 = vpop.f32.mrb[0].mxu0
    %580 = vmatprep.mubr.f32.mxu0 0.0
    %581 = vmatmul.mubr.f32.gmra.mrb[0].mxu0 %v486
    %v582 = vpop.f32.mrb[0].mxu0
    %v583 = vadd.f32 0.0, %v582
    %v584 = vpop.f32.mrb[0].mxu0
    %585 = vmatprep.mubr.f32.mxu0 0.0
    %586 = vmatmul.mubr.f32.gmra.mrb[0].mxu0 %v489
    %v587 = vpop.f32.mrb[0].mxu0
    %v588 = vpop.f32.mrb[0].mxu0
    %589 = vdwg.mxu0
    %v590 = vadd.f32 %v427, %v558
    %v591 = vadd.f32 %v432, %v563
    %v592 = vadd.f32 %v437, %v568
    %v593 = vadd.f32 %v442, %v573
    %v594 = vadd.f32 %v447, %v578
    %v595 = vadd.f32 %v452, %v583
    %v596 = vld [vmem:[%s4] sm:$0x1]
    %v598 = vlaneseq
    %v599 = vshrl.u32 %v598, 7
    %v600 = vsub.s32 0, %v599
    %v601 = vrot.slane %v596, %v600
    %v603 = vadd.f32 %v590, %v601
    %v604 = vadd.f32 %v591, %v601
    %v605 = vadd.f32 %v592, %v601
    %v606 = vadd.f32 %v593, %v601
    %v607 = vadd.f32 %v594, %v601
    %v608 = vadd.f32 %v595, %v601
    %v609 = vmax.f32 %v603, %v604
    %v610 = vmax.f32 %v605, %v606
    %v611 = vmax.f32 %v607, %v608
    %v612 = vmax.f32 %v609, 0.0
    %v613 = vmax.f32 %v610, 0.0
    %v614 = vmax.f32 %v611, 0.0
    %615 = vst.msk [vmem:[#allocation3] sm:$0xff] %vm211, 0.0
    %616 = vst.msk [vmem:[#allocation3 + $0x8] sm:$0xff] %vm211, 0.0
    %617 = vst.msk [vmem:[#allocation3 + $0x28] sm:$0xff] %vm211, 0.0
    %618 = vst.msk [vmem:[#allocation3 + $0x30] sm:$0xff] %vm211, 0.0
    %619 = vst.msk [vmem:[#allocation3 + $0x10] sm:$0xff] %vm211, %v612
    %620 = vst.msk [vmem:[#allocation3 + $0x18] sm:$0xff] %vm211, %v613
    %621 = vst.msk [vmem:[#allocation3 + $0x20] sm:$0xff] %vm211, %v614
    %v622 = vld [vmem:[#allocation3] sm:$0xff]
    %v623 = vld [vmem:[#allocation3 + $0x8] sm:$0xff]
    %v624 = vld [vmem:[#allocation3 + $0x10] sm:$0xff]
    %v625 = vld [vmem:[#allocation3 + $0x18] sm:$0xff]
    %v626 = vld [vmem:[#allocation3 + $0x20] sm:$0xff]
    %v627 = vld [vmem:[%s5] sm:$0xff]
    %v628 = vld [vmem:[%s5 + $0x8] sm:$0xff]
    %v629 = vld [vmem:[%s5 + $0x10] sm:$0xff]
    %v630 = vld [vmem:[%s5 + $0x18] sm:$0xff]
    %v631 = vld [vmem:[#allocation3 + $0x28] sm:$0xff]
    %v632 = vld [vmem:[%s5 + $0x20] sm:$0xff]
    %v633 = vld [vmem:[%s5 + $0x28] sm:$0xff]
    %v634 = vld [vmem:[%s5 + $0x30] sm:$0xff]
    %v635 = vld [vmem:[%s5 + $0x38] sm:$0xff]
    %v637 = vsel %vm211, %v623, 0
    %v640 = vsel %vm211, %v624, 0
    %v643 = vsel %vm211, %v625, 0
    %v646 = vsel %vm211, %v626, 0
    %v649 = vsel %vm211, %v631, 0
    %651 = vmatprep.subr.mxu0 0.0
    %652 = vmatpush1.msra.mxu0 %v632
    %653 = vmatprep.subr.mxu0 0.0
    %654 = vmatpush1.msra.mxu0 %v633
    %655 = vmatprep.subr.mxu0 0.0
    %656 = vmatpush1.msra.mxu0 %v634
    %657 = vmatprep.subr.mxu0 0.0
    %658 = vmatpush1.msra.mxu0 %v635
    %659 = vmatprep.subr.mxu0 0.0
    %660 = vmatpush1.msra.mxu0 0.0
    %661 = vmatprep.subr.mxu0 0.0
    %662 = vmatpush1.msra.mxu0 0.0
    %663 = vmatprep.subr.mxu0 0.0
    %664 = vmatpush1.msra.mxu0 0.0
    %665 = vmatprep.subr.mxu0 0.0
    %666 = vmatpush1.msra.mxu0 0.0
    %667 = vmatprep.subr.mxu0 0.0
    %668 = vmatpush1.msra.mxu0 0.0
    %669 = vmatprep.subr.mxu0 0.0
    %670 = vmatpush1.msra.mxu0 0.0
    %671 = vmatprep.subr.mxu0 0.0
    %672 = vmatpush1.msra.mxu0 0.0
    %673 = vmatprep.subr.mxu0 0.0
    %674 = vmatpush1.msra.mxu0 0.0
    %675 = vmatprep.subr.mxu0 0.0
    %676 = vmatpush1.msra.mxu0 0.0
    %677 = vmatprep.subr.mxu0 0.0
    %678 = vmatpush1.msra.mxu0 0.0
    %679 = vmatprep.subr.mxu0 0.0
    %680 = vmatpush1.msra.mxu0 0.0
    %681 = vmatprep.subr.mxu0 0.0
    %682 = vmatpush1.msra.mxu0 0.0
    %683 = vmatprep.subr.mxu0 0.0
    %684 = vmatpush1.msra.mxu0 0.0
    %685 = vmatprep.subr.mxu0 0.0
    %686 = vmatpush1.msra.mxu0 0.0
    %687 = vmatprep.subr.mxu0 0.0
    %688 = vmatpush1.msra.mxu0 0.0
    %689 = vmatprep.subr.mxu0 0.0
    %690 = vmatpush1.msra.mxu0 0.0
    %691 = vmatprep.subr.mxu0 0.0
    %692 = vmatpush1.msra.mxu0 0.0
    %693 = vmatprep.subr.mxu0 0.0
    %694 = vmatpush1.msra.mxu0 0.0
    %695 = vmatprep.subr.mxu0 0.0
    %696 = vmatpush1.msra.mxu0 0.0
    %697 = vmatprep.subr.mxu0 0.0
    %698 = vmatpush1.msra.mxu0 0.0
    %699 = vmatprep.subr.mxu0 0.0
    %700 = vmatpush1.msra.mxu0 0.0
    %701 = vmatprep.subr.mxu0 0.0
    %702 = vmatpush1.msra.mxu0 0.0
    %703 = vmatprep.subr.mxu0 0.0
    %704 = vmatpush1.msra.mxu0 0.0
    %705 = vmatprep.subr.mxu0 0.0
    %706 = vmatpush1.msra.mxu0 0.0
    %707 = vmatprep.subr.mxu0 0.0
    %708 = vmatpush1.msra.mxu0 0.0
    %709 = vmatprep.subr.mxu0 0.0
    %710 = vmatpush1.msra.mxu0 0.0
    %711 = vmatprep.subr.mxu0 0.0
    %712 = vmatpush1.msra.mxu0 0.0
    %713 = vmatprep.subr.mxu0 0.0
    %714 = vmatpush1.msra.mxu0 0.0
    %715 = vmatprep.mubr.f32.mxu0 0.0
    %716 = vmatmul.mubr.f32.gmra.mrb[0].mxu0 %v637
    %v717 = vpop.f32.mrb[0].mxu0
    %v718 = vadd.f32 0.0, %v717
    %v719 = vpop.f32.mrb[0].mxu0
    %720 = vmatprep.mubr.f32.mxu0 0.0
    %721 = vmatmul.mubr.f32.gmra.mrb[0].mxu0 %v640
    %v722 = vpop.f32.mrb[0].mxu0
    %v723 = vadd.f32 0.0, %v722
    %v724 = vpop.f32.mrb[0].mxu0
    %725 = vmatprep.mubr.f32.mxu0 0.0
    %726 = vmatmul.mubr.f32.gmra.mrb[0].mxu0 %v643
    %v727 = vpop.f32.mrb[0].mxu0
    %v728 = vadd.f32 0.0, %v727
    %v729 = vpop.f32.mrb[0].mxu0
    %730 = vmatprep.mubr.f32.mxu0 0.0
    %731 = vmatmul.mubr.f32.gmra.mrb[0].mxu0 %v646
    %v732 = vpop.f32.mrb[0].mxu0
    %v733 = vadd.f32 0.0, %v732
    %v734 = vpop.f32.mrb[0].mxu0
    %735 = vmatprep.mubr.f32.mxu0 0.0
    %736 = vmatmul.mubr.f32.gmra.mrb[0].mxu0 %v649
    %v737 = vpop.f32.mrb[0].mxu0
    %v738 = vpop.f32.mrb[0].mxu0
    %739 = vdwg.mxu0
    %v741 = vsel %vm211, %v622, 0
    %743 = vmatprep.subr.mxu0 0.0
    %744 = vmatpush1.msra.mxu0 %v627
    %745 = vmatprep.subr.mxu0 0.0
    %746 = vmatpush1.msra.mxu0 %v628
    %747 = vmatprep.subr.mxu0 0.0
    %748 = vmatpush1.msra.mxu0 %v629
    %749 = vmatprep.subr.mxu0 0.0
    %750 = vmatpush1.msra.mxu0 %v630
    %751 = vmatprep.subr.mxu0 0.0
    %752 = vmatpush1.msra.mxu0 0.0
    %753 = vmatprep.subr.mxu0 0.0
    %754 = vmatpush1.msra.mxu0 0.0
    %755 = vmatprep.subr.mxu0 0.0
    %756 = vmatpush1.msra.mxu0 0.0
    %757 = vmatprep.subr.mxu0 0.0
    %758 = vmatpush1.msra.mxu0 0.0
    %759 = vmatprep.subr.mxu0 0.0
    %760 = vmatpush1.msra.mxu0 0.0
    %761 = vmatprep.subr.mxu0 0.0
    %762 = vmatpush1.msra.mxu0 0.0
    %763 = vmatprep.subr.mxu0 0.0
    %764 = vmatpush1.msra.mxu0 0.0
    %765 = vmatprep.subr.mxu0 0.0
    %766 = vmatpush1.msra.mxu0 0.0
    %767 = vmatprep.subr.mxu0 0.0
    %768 = vmatpush1.msra.mxu0 0.0
    %769 = vmatprep.subr.mxu0 0.0
    %770 = vmatpush1.msra.mxu0 0.0
    %771 = vmatprep.subr.mxu0 0.0
    %772 = vmatpush1.msra.mxu0 0.0
    %773 = vmatprep.subr.mxu0 0.0
    %774 = vmatpush1.msra.mxu0 0.0
    %775 = vmatprep.subr.mxu0 0.0
    %776 = vmatpush1.msra.mxu0 0.0
    %777 = vmatprep.subr.mxu0 0.0
    %778 = vmatpush1.msra.mxu0 0.0
    %779 = vmatprep.subr.mxu0 0.0
    %780 = vmatpush1.msra.mxu0 0.0
    %781 = vmatprep.subr.mxu0 0.0
    %782 = vmatpush1.msra.mxu0 0.0
    %783 = vmatprep.subr.mxu0 0.0
    %784 = vmatpush1.msra.mxu0 0.0
    %785 = vmatprep.subr.mxu0 0.0
    %786 = vmatpush1.msra.mxu0 0.0
    %787 = vmatprep.subr.mxu0 0.0
    %788 = vmatpush1.msra.mxu0 0.0
    %789 = vmatprep.subr.mxu0 0.0
    %790 = vmatpush1.msra.mxu0 0.0
    %791 = vmatprep.subr.mxu0 0.0
    %792 = vmatpush1.msra.mxu0 0.0
    %793 = vmatprep.subr.mxu0 0.0
    %794 = vmatpush1.msra.mxu0 0.0
    %795 = vmatprep.subr.mxu0 0.0
    %796 = vmatpush1.msra.mxu0 0.0
    %797 = vmatprep.subr.mxu0 0.0
    %798 = vmatpush1.msra.mxu0 0.0
    %799 = vmatprep.subr.mxu0 0.0
    %800 = vmatpush1.msra.mxu0 0.0
    %801 = vmatprep.subr.mxu0 0.0
    %802 = vmatpush1.msra.mxu0 0.0
    %803 = vmatprep.subr.mxu0 0.0
    %804 = vmatpush1.msra.mxu0 0.0
    %805 = vmatprep.subr.mxu0 0.0
    %806 = vmatpush1.msra.mxu0 0.0
    %807 = vmatprep.mubr.f32.mxu0 0.0
    %808 = vmatmul.mubr.f32.gmra.mrb[0].mxu0 %v741
    %v809 = vpop.f32.mrb[0].mxu0
    %v810 = vadd.f32 %v718, %v809
    %v811 = vpop.f32.mrb[0].mxu0
    %812 = vmatprep.mubr.f32.mxu0 0.0
    %813 = vmatmul.mubr.f32.gmra.mrb[0].mxu0 %v637
    %v814 = vpop.f32.mrb[0].mxu0
    %v815 = vadd.f32 %v723, %v814
    %v816 = vpop.f32.mrb[0].mxu0
    %817 = vmatprep.mubr.f32.mxu0 0.0
    %818 = vmatmul.mubr.f32.gmra.mrb[0].mxu0 %v640
    %v819 = vpop.f32.mrb[0].mxu0
    %v820 = vadd.f32 %v728, %v819
    %v821 = vpop.f32.mrb[0].mxu0
    %822 = vmatprep.mubr.f32.mxu0 0.0
    %823 = vmatmul.mubr.f32.gmra.mrb[0].mxu0 %v643
    %v824 = vpop.f32.mrb[0].mxu0
    %v825 = vadd.f32 %v733, %v824
    %v826 = vpop.f32.mrb[0].mxu0
    %827 = vmatprep.mubr.f32.mxu0 0.0
    %828 = vmatmul.mubr.f32.gmra.mrb[0].mxu0 %v646
    %v829 = vpop.f32.mrb[0].mxu0
    %v830 = vpop.f32.mrb[0].mxu0
    %831 = vdwg.mxu0
    %v832 = vld [vmem:[#allocation3 + $0x10] sm:$0xff]
    %v833 = vld [vmem:[#allocation3 + $0x18] sm:$0xff]
    %v834 = vld [vmem:[#allocation3 + $0x20] sm:$0xff]
    %v835 = vld [vmem:[#allocation3 + $0x28] sm:$0xff]
    %v836 = vld [vmem:[#allocation3 + $0x30] sm:$0xff]
    %v837 = vld [vmem:[%s5 + $0x40] sm:$0xff]
    %v838 = vld [vmem:[%s5 + $0x48] sm:$0xff]
    %v839 = vld [vmem:[%s5 + $0x50] sm:$0xff]
    %v840 = vld [vmem:[%s5 + $0x58] sm:$0xff]
    %v842 = vsel %vm211, %v832, 0
    %v845 = vsel %vm211, %v833, 0
    %v848 = vsel %vm211, %v834, 0
    %v851 = vsel %vm211, %v835, 0
    %v854 = vsel %vm211, %v836, 0
    %856 = vmatprep.subr.mxu0 0.0
    %857 = vmatpush1.msra.mxu0 %v837
    %858 = vmatprep.subr.mxu0 0.0
    %859 = vmatpush1.msra.mxu0 %v838
    %860 = vmatprep.subr.mxu0 0.0
    %861 = vmatpush1.msra.mxu0 %v839
    %862 = vmatprep.subr.mxu0 0.0
    %863 = vmatpush1.msra.mxu0 %v840
    %864 = vmatprep.subr.mxu0 0.0
    %865 = vmatpush1.msra.mxu0 0.0
    %866 = vmatprep.subr.mxu0 0.0
    %867 = vmatpush1.msra.mxu0 0.0
    %868 = vmatprep.subr.mxu0 0.0
    %869 = vmatpush1.msra.mxu0 0.0
    %870 = vmatprep.subr.mxu0 0.0
    %871 = vmatpush1.msra.mxu0 0.0
    %872 = vmatprep.subr.mxu0 0.0
    %873 = vmatpush1.msra.mxu0 0.0
    %874 = vmatprep.subr.mxu0 0.0
    %875 = vmatpush1.msra.mxu0 0.0
    %876 = vmatprep.subr.mxu0 0.0
    %877 = vmatpush1.msra.mxu0 0.0
    %878 = vmatprep.subr.mxu0 0.0
    %879 = vmatpush1.msra.mxu0 0.0
    %880 = vmatprep.subr.mxu0 0.0
    %881 = vmatpush1.msra.mxu0 0.0
    %882 = vmatprep.subr.mxu0 0.0
    %883 = vmatpush1.msra.mxu0 0.0
    %884 = vmatprep.subr.mxu0 0.0
    %885 = vmatpush1.msra.mxu0 0.0
    %886 = vmatprep.subr.mxu0 0.0
    %887 = vmatpush1.msra.mxu0 0.0
    %888 = vmatprep.subr.mxu0 0.0
    %889 = vmatpush1.msra.mxu0 0.0
    %890 = vmatprep.subr.mxu0 0.0
    %891 = vmatpush1.msra.mxu0 0.0
    %892 = vmatprep.subr.mxu0 0.0
    %893 = vmatpush1.msra.mxu0 0.0
    %894 = vmatprep.subr.mxu0 0.0
    %895 = vmatpush1.msra.mxu0 0.0
    %896 = vmatprep.subr.mxu0 0.0
    %897 = vmatpush1.msra.mxu0 0.0
    %898 = vmatprep.subr.mxu0 0.0
    %899 = vmatpush1.msra.mxu0 0.0
    %900 = vmatprep.subr.mxu0 0.0
    %901 = vmatpush1.msra.mxu0 0.0
    %902 = vmatprep.subr.mxu0 0.0
    %903 = vmatpush1.msra.mxu0 0.0
    %904 = vmatprep.subr.mxu0 0.0
    %905 = vmatpush1.msra.mxu0 0.0
    %906 = vmatprep.subr.mxu0 0.0
    %907 = vmatpush1.msra.mxu0 0.0
    %908 = vmatprep.subr.mxu0 0.0
    %909 = vmatpush1.msra.mxu0 0.0
    %910 = vmatprep.subr.mxu0 0.0
    %911 = vmatpush1.msra.mxu0 0.0
    %912 = vmatprep.subr.mxu0 0.0
    %913 = vmatpush1.msra.mxu0 0.0
    %914 = vmatprep.subr.mxu0 0.0
    %915 = vmatpush1.msra.mxu0 0.0
    %916 = vmatprep.subr.mxu0 0.0
    %917 = vmatpush1.msra.mxu0 0.0
    %918 = vmatprep.subr.mxu0 0.0
    %919 = vmatpush1.msra.mxu0 0.0
    %920 = vmatprep.mubr.f32.mxu0 0.0
    %921 = vmatmul.mubr.f32.gmra.mrb[0].mxu0 %v842
    %v922 = vpop.f32.mrb[0].mxu0
    %v923 = vadd.f32 0.0, %v922
    %v924 = vpop.f32.mrb[0].mxu0
    %925 = vmatprep.mubr.f32.mxu0 0.0
    %926 = vmatmul.mubr.f32.gmra.mrb[0].mxu0 %v845
    %v927 = vpop.f32.mrb[0].mxu0
    %v928 = vadd.f32 0.0, %v927
    %v929 = vpop.f32.mrb[0].mxu0
    %930 = vmatprep.mubr.f32.mxu0 0.0
    %931 = vmatmul.mubr.f32.gmra.mrb[0].mxu0 %v848
    %v932 = vpop.f32.mrb[0].mxu0
    %v933 = vadd.f32 0.0, %v932
    %v934 = vpop.f32.mrb[0].mxu0
    %935 = vmatprep.mubr.f32.mxu0 0.0
    %936 = vmatmul.mubr.f32.gmra.mrb[0].mxu0 %v851
    %v937 = vpop.f32.mrb[0].mxu0
    %v938 = vadd.f32 0.0, %v937
    %v939 = vpop.f32.mrb[0].mxu0
    %940 = vmatprep.mubr.f32.mxu0 0.0
    %941 = vmatmul.mubr.f32.gmra.mrb[0].mxu0 %v854
    %v942 = vpop.f32.mrb[0].mxu0
    %v943 = vpop.f32.mrb[0].mxu0
    %944 = vdwg.mxu0
    %v945 = vadd.f32 %v810, %v923
    %v946 = vadd.f32 %v815, %v928
    %v947 = vadd.f32 %v820, %v933
    %v948 = vadd.f32 %v825, %v938
    %v949 = vld [vmem:[%s6] sm:$0x1]
    %v951 = vlaneseq
    %v952 = vshrl.u32 %v951, 7
    %v953 = vsub.s32 0, %v952
    %v954 = vrot.slane %v949, %v953
    %v956 = vadd.f32 %v945, %v954
    %v957 = vadd.f32 %v946, %v954
    %v958 = vadd.f32 %v947, %v954
    %v959 = vadd.f32 %v948, %v954
    %v960 = vmax.f32 %v956, %v957
    %v961 = vmax.f32 %v958, %v959
    %v962 = vmax.f32 %v960, 0.0
    %v963 = vmax.f32 %v961, 0.0
    %v964 = vld [vmem:[%s7] sm:$0xff]
    %v965 = vld [vmem:[%s7 + $0x8] sm:$0xff]
    %v966 = vld [vmem:[%s7 + $0x10] sm:$0xff]
    %v967 = vld [vmem:[%s7 + $0x18] sm:$0xff]
    %v968 = vld [vmem:[%s7 + $0x20] sm:$0xff]
    %v969 = vld [vmem:[%s7 + $0x28] sm:$0xff]
    %v970 = vld [vmem:[%s7 + $0x30] sm:$0xff]
    %v971 = vld [vmem:[%s7 + $0x38] sm:$0xff]
    %v972 = vld [vmem:[%s7 + $0x40] sm:$0xff]
    %v973 = vld [vmem:[%s7 + $0x48] sm:$0xff]
    %v974 = vld [vmem:[%s7 + $0x50] sm:$0xff]
    %v975 = vld [vmem:[%s7 + $0x58] sm:$0xff]
    %v976 = vld [vmem:[%s7 + $0x60] sm:$0xff]
    %v977 = vld [vmem:[%s7 + $0x68] sm:$0xff]
    %v978 = vld [vmem:[%s7 + $0x70] sm:$0xff]
    %v979 = vld [vmem:[%s7 + $0x78] sm:$0xff]
    %vm980 = vcmask 523264
    %v982 = vsel %vm980, %v963, 0
    %984 = vmatprep.subr.mxu0 0.0
    %985 = vmatpush1.msra.mxu0 %v972
    %986 = vmatprep.subr.mxu0 0.0
    %987 = vmatpush1.msra.mxu0 %v973
    %988 = vmatprep.subr.mxu0 0.0
    %989 = vmatpush1.msra.mxu0 %v974
    %990 = vmatprep.subr.mxu0 0.0
    %991 = vmatpush1.msra.mxu0 %v975
    %992 = vmatprep.subr.mxu0 0.0
    %993 = vmatpush1.msra.mxu0 %v976
    %994 = vmatprep.subr.mxu0 0.0
    %995 = vmatpush1.msra.mxu0 %v977
    %996 = vmatprep.subr.mxu0 0.0
    %997 = vmatpush1.msra.mxu0 %v978
    %998 = vmatprep.subr.mxu0 0.0
    %999 = vmatpush1.msra.mxu0 %v979
    %1000 = vmatprep.subr.mxu0 0.0
    %1001 = vmatpush1.msra.mxu0 0.0
    %1002 = vmatprep.subr.mxu0 0.0
    %1003 = vmatpush1.msra.mxu0 0.0
    %1004 = vmatprep.subr.mxu0 0.0
    %1005 = vmatpush1.msra.mxu0 0.0
    %1006 = vmatprep.subr.mxu0 0.0
    %1007 = vmatpush1.msra.mxu0 0.0
    %1008 = vmatprep.subr.mxu0 0.0
    %1009 = vmatpush1.msra.mxu0 0.0
    %1010 = vmatprep.subr.mxu0 0.0
    %1011 = vmatpush1.msra.mxu0 0.0
    %1012 = vmatprep.subr.mxu0 0.0
    %1013 = vmatpush1.msra.mxu0 0.0
    %1014 = vmatprep.subr.mxu0 0.0
    %1015 = vmatpush1.msra.mxu0 0.0
    %1016 = vmatprep.subr.mxu0 0.0
    %1017 = vmatpush1.msra.mxu0 0.0
    %1018 = vmatprep.subr.mxu0 0.0
    %1019 = vmatpush1.msra.mxu0 0.0
    %1020 = vmatprep.subr.mxu0 0.0
    %1021 = vmatpush1.msra.mxu0 0.0
    %1022 = vmatprep.subr.mxu0 0.0
    %1023 = vmatpush1.msra.mxu0 0.0
    %1024 = vmatprep.subr.mxu0 0.0
    %1025 = vmatpush1.msra.mxu0 0.0
    %1026 = vmatprep.subr.mxu0 0.0
    %1027 = vmatpush1.msra.mxu0 0.0
    %1028 = vmatprep.subr.mxu0 0.0
    %1029 = vmatpush1.msra.mxu0 0.0
    %1030 = vmatprep.subr.mxu0 0.0
    %1031 = vmatpush1.msra.mxu0 0.0
    %1032 = vmatprep.subr.mxu0 0.0
    %1033 = vmatpush1.msra.mxu0 0.0
    %1034 = vmatprep.subr.mxu0 0.0
    %1035 = vmatpush1.msra.mxu0 0.0
    %1036 = vmatprep.subr.mxu0 0.0
    %1037 = vmatpush1.msra.mxu0 0.0
    %1038 = vmatprep.subr.mxu0 0.0
    %1039 = vmatpush1.msra.mxu0 0.0
    %1040 = vmatprep.subr.mxu0 0.0
    %1041 = vmatpush1.msra.mxu0 0.0
    %1042 = vmatprep.subr.mxu0 0.0
    %1043 = vmatpush1.msra.mxu0 0.0
    %1044 = vmatprep.subr.mxu0 0.0
    %1045 = vmatpush1.msra.mxu0 0.0
    %1046 = vmatprep.subr.mxu0 0.0
    %1047 = vmatpush1.msra.mxu0 0.0
    %1048 = vmatprep.mubr.f32.mxu0 0.0
    %1049 = vmatmul.mubr.f32.gmra.mrb[0].mxu0 %v982
    %v1050 = vpop.f32.mrb[0].mxu0
    %v1051 = vadd.f32 0.0, %v1050
    %v1052 = vpop.f32.mrb[0].mxu0
    %1053 = vdwg.mxu0
    %v1055 = vsel %vm980, %v962, 0
    %1057 = vmatprep.subr.mxu0 0.0
    %1058 = vmatpush1.msra.mxu0 %v964
    %1059 = vmatprep.subr.mxu0 0.0
    %1060 = vmatpush1.msra.mxu0 %v965
    %1061 = vmatprep.subr.mxu0 0.0
    %1062 = vmatpush1.msra.mxu0 %v966
    %1063 = vmatprep.subr.mxu0 0.0
    %1064 = vmatpush1.msra.mxu0 %v967
    %1065 = vmatprep.subr.mxu0 0.0
    %1066 = vmatpush1.msra.mxu0 %v968
    %1067 = vmatprep.subr.mxu0 0.0
    %1068 = vmatpush1.msra.mxu0 %v969
    %1069 = vmatprep.subr.mxu0 0.0
    %1070 = vmatpush1.msra.mxu0 %v970
    %1071 = vmatprep.subr.mxu0 0.0
    %1072 = vmatpush1.msra.mxu0 %v971
    %1073 = vmatprep.subr.mxu0 0.0
    %1074 = vmatpush1.msra.mxu0 0.0
    %1075 = vmatprep.subr.mxu0 0.0
    %1076 = vmatpush1.msra.mxu0 0.0
    %1077 = vmatprep.subr.mxu0 0.0
    %1078 = vmatpush1.msra.mxu0 0.0
    %1079 = vmatprep.subr.mxu0 0.0
    %1080 = vmatpush1.msra.mxu0 0.0
    %1081 = vmatprep.subr.mxu0 0.0
    %1082 = vmatpush1.msra.mxu0 0.0
    %1083 = vmatprep.subr.mxu0 0.0
    %1084 = vmatpush1.msra.mxu0 0.0
    %1085 = vmatprep.subr.mxu0 0.0
    %1086 = vmatpush1.msra.mxu0 0.0
    %1087 = vmatprep.subr.mxu0 0.0
    %1088 = vmatpush1.msra.mxu0 0.0
    %1089 = vmatprep.subr.mxu0 0.0
    %1090 = vmatpush1.msra.mxu0 0.0
    %1091 = vmatprep.subr.mxu0 0.0
    %1092 = vmatpush1.msra.mxu0 0.0
    %1093 = vmatprep.subr.mxu0 0.0
    %1094 = vmatpush1.msra.mxu0 0.0
    %1095 = vmatprep.subr.mxu0 0.0
    %1096 = vmatpush1.msra.mxu0 0.0
    %1097 = vmatprep.subr.mxu0 0.0
    %1098 = vmatpush1.msra.mxu0 0.0
    %1099 = vmatprep.subr.mxu0 0.0
    %1100 = vmatpush1.msra.mxu0 0.0
    %1101 = vmatprep.subr.mxu0 0.0
    %1102 = vmatpush1.msra.mxu0 0.0
    %1103 = vmatprep.subr.mxu0 0.0
    %1104 = vmatpush1.msra.mxu0 0.0
    %1105 = vmatprep.subr.mxu0 0.0
    %1106 = vmatpush1.msra.mxu0 0.0
    %1107 = vmatprep.subr.mxu0 0.0
    %1108 = vmatpush1.msra.mxu0 0.0
    %1109 = vmatprep.subr.mxu0 0.0
    %1110 = vmatpush1.msra.mxu0 0.0
    %1111 = vmatprep.subr.mxu0 0.0
    %1112 = vmatpush1.msra.mxu0 0.0
    %1113 = vmatprep.subr.mxu0 0.0
    %1114 = vmatpush1.msra.mxu0 0.0
    %1115 = vmatprep.subr.mxu0 0.0
    %1116 = vmatpush1.msra.mxu0 0.0
    %1117 = vmatprep.subr.mxu0 0.0
    %1118 = vmatpush1.msra.mxu0 0.0
    %1119 = vmatprep.subr.mxu0 0.0
    %1120 = vmatpush1.msra.mxu0 0.0
    %1121 = vmatprep.mubr.f32.mxu0 0.0
    %1122 = vmatmul.mubr.f32.gmra.mrb[0].mxu0 %v1055
    %v1123 = vpop.f32.mrb[0].mxu0
    %v1124 = vadd.f32 %v1051, %v1123
    %v1125 = vpop.f32.mrb[0].mxu0
    %1126 = vdwg.mxu0
    %v1127 = vld [vmem:[%s8] sm:$0x1]
    %v1129 = vlaneseq
    %v1130 = vshrl.u32 %v1129, 7
    %v1131 = vsub.s32 0, %v1130
    %v1132 = vrot.slane %v1127, %v1131
    %v1134 = vadd.f32 %v1124, %v1132
    %v1135 = vmul.f32 %v1134, %v1134
    %1136 = vadd.xlane.f32.xlu0 %v1135
    %v1137 = vpop.xlane.xlu0 %1136
    %v1138 = vmax.f32 %v1137, 1e-24
    %v1139 = vrsqrt.pop %v1138
    %v1140 = vmul.f32 %v1134, %v1139
    %1141 = vst [vmem:[#allocation4] sm:$0xff] %v1140
    // Predicated region
    $region38: #{tpu_custom_call.1} parent=1 // pred_check
      _
    $region39: #{tpu_custom_call.1} parent=1 // pred_check_branch
      %1143 = sbr.rel (0) target = $region41
    $region40: #{tpu_custom_call.1} parent=1 // pred_region
      %s1145 = ssub.s32 128, 128
      %1146 = vsyncadd [#allocation5], %s1145
      %s1148 = sshll.u32 [#allocation4], 4
      %s1149 = int_to_ptr.vmem [resolvable:$true] %s1148
      %1151 = dma.vmem_to_hbm [thread:$0]  %s1149, 128, %s9, [#allocation5]
    $region41: #{tpu_custom_call.1} parent=1 // pred_fallthru
      _
    // Predicated region
    $region42: #{tpu_custom_call.1} parent=1 // pred_check
      _
    $region43: #{tpu_custom_call.1} parent=1 // pred_check_branch
      %1153 = sbr.rel (0) target = $region45
    $region44: #{tpu_custom_call.1} parent=1 // pred_region
      %1154 = dma.done [#allocation5], 128
    $region45: #{tpu_custom_call.1} parent=1 // pred_fallthru
      _
    %1155 = vsyncpa [#allocation5], 1

</llo_original>
